<compile_context>
chip_gen: v7x
topology: tpu7x:2x2x1
jax: 0.10.0
libtpu: 0.0.40
codegen_flags: <defaults>
</compile_context>

<pallas_src>
import jax
import jax.numpy as jnp
from jax import lax
from jax.experimental import pallas as pl
from jax.experimental.pallas import tpu as pltpu

# ---- model hyper-parameters (small, consistent with the module's __init__) ----
VOCAB = 32       # vocabulary_len
EMBED = 16       # embedding_size
HIDDEN = 32      # hidden_size
CLASSES = 4      # nb_classes
DROPOUT_P = 0.5  # drop_out (identity at inference)
BATCH = 2
SEQ = 8

HP = 128         # hidden padded to one lane tile (gate slices become lane-aligned)
CP = 128         # classes padded to one lane tile (lane-dense output store)
NEG = -1e30      # bias for padded class lanes -> softmax contribution exactly 0


def gru_classifier_kernel(tok_ref, embed_ref, wih_ref, whh_ref, bi_ref, bhn_ref,
                          wout_ref, bout_ref, out_ref, proj_ref):
    """tok_ref: (B, S) int32 in SMEM; weights padded to 128-lane gates; out_ref: (B, CP)."""
    B, S = tok_ref.shape
    HPk = whh_ref.shape[0]   # == HP

    # (1) Fused embedding + input projection, ONE matmul, hoisted out of the recurrence:
    #     proj[v] = embed[v] @ W_ih + (b_ih + [b_hh_r, b_hh_z, 0])        -> (VOCAB, 3*HP)
    proj_ref[...] = jnp.dot(embed_ref[...], wih_ref[...],
                            preferred_element_type=jnp.float32) + bi_ref[...]

    # (4) bias broadcast hoisted out of the loop (JAX does not CSE broadcast_in_dim).
    bhn = jnp.broadcast_to(bhn_ref[...], (B, HPk))          # (B, HP)

    # (2)+(3) recurrence: h stays in vregs; loop fully unrolled (S is static & tiny).
    h = jnp.zeros((B, HPk), jnp.float32)
    for t in range(S):
        # per-step embedding gather of pre-projected rows (one row per batch element).
        gi = jnp.concatenate(
            [proj_ref[pl.ds(tok_ref[b, t], 1), :] for b in range(B)], axis=0)  # (B, 3*HP)
        gh = jnp.dot(h, whh_ref[...], preferred_element_type=jnp.float32)      # (B, 3*HP)
        # (5) lane-tile-aligned gate slices (each exactly 128 lanes wide).
        r = jax.nn.sigmoid(gi[:, 0:HPk] + gh[:, 0:HPk])
        z = jax.nn.sigmoid(gi[:, HPk:2 * HPk] + gh[:, HPk:2 * HPk])
        n = jnp.tanh(gi[:, 2 * HPk:3 * HPk] + r * (gh[:, 2 * HPk:3 * HPk] + bhn))
        h = (1.0 - z) * n + z * h

    # TODO(synk): training-mode dropout (p=0.5) not implemented here (inference identity).

    # (6) classifier + softmax on a lane-dense padded layout; padded class lanes have
    #     bias -1e30 so exp(.) underflows to 0 and the softmax equals the 4-class softmax.
    logits = jnp.dot(h, wout_ref[...], preferred_element_type=jnp.float32) + bout_ref[...]
    m = jnp.max(logits, axis=-1, keepdims=True)
    e = jnp.exp(logits - m)
    out_ref[...] = e / jnp.sum(e, axis=-1, keepdims=True)


def init_params(key):
    """Logical (PyTorch-shaped) parameters, deterministic."""
    ks = jax.random.split(key, 8)
    s = 1.0 / jnp.sqrt(HIDDEN)
    return {
        "embed":   jax.random.normal(ks[0], (VOCAB, EMBED), jnp.float32),
        "w_ih_t":  jax.random.uniform(ks[1], (EMBED, 3 * HIDDEN), jnp.float32, -s, s),
        "w_hh_t":  jax.random.uniform(ks[2], (HIDDEN, 3 * HIDDEN), jnp.float32, -s, s),
        "b_ih":    jax.random.uniform(ks[3], (1, 3 * HIDDEN), jnp.float32, -s, s),
        "b_hh":    jax.random.uniform(ks[4], (1, 3 * HIDDEN), jnp.float32, -s, s),
        "w_out_t": jax.random.uniform(ks[5], (HIDDEN, CLASSES), jnp.float32, -s, s),
        "b_out":   jax.random.uniform(ks[6], (1, CLASSES), jnp.float32, -s, s),
    }


def pad_params_for_kernel(p):
    """One-time repack: pad every gate / the classifier to 128-lane boundaries and
    pre-sum the r/z biases (b_ih + b_hh); the n-gate b_hh stays separate."""
    H = HIDDEN
    w_ih_p = jnp.zeros((EMBED, 3 * HP), jnp.float32)
    w_hh_p = jnp.zeros((HP, 3 * HP), jnp.float32)
    b_i_p = jnp.zeros((1, 3 * HP), jnp.float32)
    b_comb = p["b_ih"].at[:, 0:2 * H].add(p["b_hh"][:, 0:2 * H])   # r,z: b_ih+b_hh; n: b_ih
    for g in range(3):
        w_ih_p = w_ih_p.at[:, g * HP:g * HP + H].set(p["w_ih_t"][:, g * H:(g + 1) * H])
        w_hh_p = w_hh_p.at[:H, g * HP:g * HP + H].set(p["w_hh_t"][:, g * H:(g + 1) * H])
        b_i_p = b_i_p.at[:, g * HP:g * HP + H].set(b_comb[:, g * H:(g + 1) * H])
    b_hn_p = jnp.zeros((1, HP), jnp.float32).at[:, :H].set(p["b_hh"][:, 2 * H:3 * H])
    w_out_p = jnp.zeros((HP, CP), jnp.float32).at[:H, :CLASSES].set(p["w_out_t"])
    b_out_p = jnp.full((1, CP), NEG, jnp.float32).at[:, :CLASSES].set(p["b_out"])
    return {"embed": p["embed"], "w_ih_p": w_ih_p, "w_hh_p": w_hh_p,
            "b_i_p": b_i_p, "b_hn_p": b_hn_p, "w_out_p": w_out_p, "b_out_p": b_out_p}


@jax.jit
def rnn_classifier_forward(tokens, kparams):
    """tokens: (B, S) int32  ->  (B, CLASSES) float32 softmax probabilities."""
    B, S = tokens.shape
    vmem = pl.BlockSpec(memory_space=pltpu.MemorySpace.VMEM)
    smem = pl.BlockSpec(memory_space=pltpu.MemorySpace.SMEM)
    probs_padded = pl.pallas_call(
        gru_classifier_kernel,
        out_shape=jax.ShapeDtypeStruct((B, CP), jnp.float32),
        in_specs=[smem, vmem, vmem, vmem, vmem, vmem, vmem, vmem],
        out_specs=vmem,
        scratch_shapes=[pltpu.VMEM((VOCAB, 3 * HP), jnp.float32)],  # projected vocab table
    )(tokens.astype(jnp.int32), kparams["embed"], kparams["w_ih_p"], kparams["w_hh_p"],
      kparams["b_i_p"], kparams["b_hn_p"], kparams["w_out_p"], kparams["b_out_p"])
    return probs_padded[:, :CLASSES]


def reference_forward(tokens, p):
    """Pure-JAX reference matching nn.GRU (gate order r,z,n) + Linear + softmax."""
    H = HIDDEN
    hp = lax.Precision.HIGHEST
    emb = jnp.take(p["embed"], tokens, axis=0)            # (B, S, E)
    x = jnp.transpose(emb, (1, 0, 2))                     # (S, B, E)
    h = jnp.zeros((tokens.shape[0], H), jnp.float32)

    def step(h, x_t):
        gi = jnp.dot(x_t, p["w_ih_t"], precision=hp) + p["b_ih"]
        gh = jnp.dot(h, p["w_hh_t"], precision=hp) + p["b_hh"]
        r = jax.nn.sigmoid(gi[:, :H] + gh[:, :H])
        z = jax.nn.sigmoid(gi[:, H:2 * H] + gh[:, H:2 * H])
        n = jnp.tanh(gi[:, 2 * H:] + r * gh[:, 2 * H:])
        return (1.0 - z) * n + z * h, None

    h, _ = lax.scan(step, h, x)
    logits = jnp.dot(h, p["w_out_t"], precision=hp) + p["b_out"]
    m = jnp.max(logits, axis=-1, keepdims=True)
    e = jnp.exp(logits - m)
    return e / jnp.sum(e, axis=-1, keepdims=True)


if __name__ == "__main__":
    key = jax.random.PRNGKey(0)
    k_tok, k_par = jax.random.split(key)
    tokens = jax.random.randint(k_tok, (BATCH, SEQ), 0, VOCAB, dtype=jnp.int32)
    params = init_params(k_par)
    kparams = pad_params_for_kernel(params)

    probs = rnn_classifier_forward(tokens, kparams)
    jax.block_until_ready(probs)

    assert probs.shape == (BATCH, CLASSES)
    assert bool(jnp.all(jnp.isfinite(probs)))
    assert bool(jnp.allclose(jnp.sum(probs, axis=-1), 1.0, atol=1e-5))

    ref = reference_forward(tokens, params)
    max_diff = float(jnp.max(jnp.abs(probs - ref)))
    assert bool(jnp.allclose(probs, ref, atol=1e-2)), f"max abs diff vs reference: {max_diff}"

    print("KERNEL_OK")
</pallas_src>

<mosaic_0001>
module attributes {stable_mosaic.version = 11 : i64} {
  func.func @gru_classifier_kernel(%arg0: memref<2x8xi32, #tpu.memory_space<smem>>, %arg1: memref<32x16xf32, #tpu.memory_space<vmem>>, %arg2: memref<16x384xf32, #tpu.memory_space<vmem>>, %arg3: memref<128x384xf32, #tpu.memory_space<vmem>>, %arg4: memref<1x384xf32, #tpu.memory_space<vmem>>, %arg5: memref<1x128xf32, #tpu.memory_space<vmem>>, %arg6: memref<128x128xf32, #tpu.memory_space<vmem>>, %arg7: memref<1x128xf32, #tpu.memory_space<vmem>>, %arg8: memref<2x128xf32, #tpu.memory_space<vmem>>, %arg9: memref<32x384xf32, #tpu.memory_space<vmem>>) attributes {dimension_semantics = [], scalar_prefetch = 0 : i64, scratch_operands = 1 : i64, tpu.core_type = #tpu.core_type<tc>} {
    %c0 = arith.constant 0 : index
    %c0_0 = arith.constant 0 : index
    %0 = vector.load %arg1[%c0, %c0_0] : memref<32x16xf32, #tpu.memory_space<vmem>>, vector<32x16xf32>
    %c0_1 = arith.constant 0 : index
    %c0_2 = arith.constant 0 : index
    %1 = vector.load %arg2[%c0_1, %c0_2] : memref<16x384xf32, #tpu.memory_space<vmem>>, vector<16x384xf32>
    %cst = arith.constant dense<0.000000e+00> : vector<32x384xf32>
    %2 = tpu.matmul %0, %1, %cst {dimension_numbers = #tpu.dot_dimension_numbers<[1], [0], [0], [1], [0, 0, 1, 1], [], []>} : vector<32x16xf32>, vector<16x384xf32>, vector<32x384xf32> -> vector<32x384xf32>
    %c0_3 = arith.constant 0 : index
    %c0_4 = arith.constant 0 : index
    %3 = vector.load %arg4[%c0_3, %c0_4] : memref<1x384xf32, #tpu.memory_space<vmem>>, vector<1x384xf32>
    %4 = vector.broadcast %3 : vector<1x384xf32> to vector<32x384xf32>
    %5 = arith.addf %2, %4 : vector<32x384xf32>
    %c0_5 = arith.constant 0 : index
    %c0_6 = arith.constant 0 : index
    %6 = vector.load %arg9[%c0_5, %c0_6] : memref<32x384xf32, #tpu.memory_space<vmem>>, vector<32x384xf32>
    tpu.vector_store %arg9[%c0_5, %c0_6], %5 {strides = array<i32>} : memref<32x384xf32, #tpu.memory_space<vmem>>, vector<32x384xf32>,
    %c0_7 = arith.constant 0 : index
    %c0_8 = arith.constant 0 : index
    %7 = vector.load %arg5[%c0_7, %c0_8] : memref<1x128xf32, #tpu.memory_space<vmem>>, vector<1x128xf32>
    %8 = vector.shape_cast %7 : vector<1x128xf32> to vector<1x128xf32>
    %9 = vector.broadcast %8 : vector<1x128xf32> to vector<2x128xf32>
    %cst_9 = arith.constant 0.000000e+00 : f32
    %10 = vector.broadcast %cst_9 : f32 to vector<2x128xf32>
    %c0_10 = arith.constant 0 : index
    %c0_11 = arith.constant 0 : index
    %11 = memref.load %arg0[%c0_10, %c0_11] : memref<2x8xi32, #tpu.memory_space<smem>>
    %12 = arith.index_cast %11 : i32 to index
    %c0_12 = arith.constant 0 : index
    %13 = vector.load %arg9[%12, %c0_12] : memref<32x384xf32, #tpu.memory_space<vmem>>, vector<1x384xf32>
    %c1 = arith.constant 1 : index
    %c0_13 = arith.constant 0 : index
    %14 = memref.load %arg0[%c1, %c0_13] : memref<2x8xi32, #tpu.memory_space<smem>>
    %15 = arith.index_cast %14 : i32 to index
    %c0_14 = arith.constant 0 : index
    %16 = vector.load %arg9[%15, %c0_14] : memref<32x384xf32, #tpu.memory_space<vmem>>, vector<1x384xf32>
    %17 = tpu.concatenate %13, %16 in 0 : vector<1x384xf32>, vector<1x384xf32> -> vector<2x384xf32>
    %c0_15 = arith.constant 0 : index
    %c0_16 = arith.constant 0 : index
    %18 = vector.load %arg3[%c0_15, %c0_16] : memref<128x384xf32, #tpu.memory_space<vmem>>, vector<128x384xf32>
    %cst_17 = arith.constant dense<0.000000e+00> : vector<2x384xf32>
    %19 = tpu.matmul %10, %18, %cst_17 {dimension_numbers = #tpu.dot_dimension_numbers<[1], [0], [0], [1], [0, 0, 1, 1], [], []>} : vector<2x128xf32>, vector<128x384xf32>, vector<2x384xf32> -> vector<2x384xf32>
    %20 = vector.extract_strided_slice %17 {offsets = [0, 0], sizes = [2, 128], strides = [1, 1]} : vector<2x384xf32> to vector<2x128xf32>
    %21 = vector.extract_strided_slice %19 {offsets = [0, 0], sizes = [2, 128], strides = [1, 1]} : vector<2x384xf32> to vector<2x128xf32>
    %22 = arith.addf %20, %21 : vector<2x128xf32>
    %23 = arith.negf %22 : vector<2x128xf32>
    %24 = math.exp %23 : vector<2x128xf32>
    %cst_18 = arith.constant 1.000000e+00 : f32
    %25 = vector.broadcast %cst_18 : f32 to vector<2x128xf32>
    %26 = arith.addf %25, %24 : vector<2x128xf32>
    %27 = arith.divf %25, %26 : vector<2x128xf32>
    %28 = vector.extract_strided_slice %17 {offsets = [0, 128], sizes = [2, 128], strides = [1, 1]} : vector<2x384xf32> to vector<2x128xf32>
    %29 = vector.extract_strided_slice %19 {offsets = [0, 128], sizes = [2, 128], strides = [1, 1]} : vector<2x384xf32> to vector<2x128xf32>
    %30 = arith.addf %28, %29 : vector<2x128xf32>
    %31 = arith.negf %30 : vector<2x128xf32>
    %32 = math.exp %31 : vector<2x128xf32>
    %cst_19 = arith.constant 1.000000e+00 : f32
    %33 = vector.broadcast %cst_19 : f32 to vector<2x128xf32>
    %34 = arith.addf %33, %32 : vector<2x128xf32>
    %35 = arith.divf %33, %34 : vector<2x128xf32>
    %36 = vector.extract_strided_slice %17 {offsets = [0, 256], sizes = [2, 128], strides = [1, 1]} : vector<2x384xf32> to vector<2x128xf32>
    %37 = vector.extract_strided_slice %19 {offsets = [0, 256], sizes = [2, 128], strides = [1, 1]} : vector<2x384xf32> to vector<2x128xf32>
    %38 = arith.addf %37, %9 : vector<2x128xf32>
    %39 = arith.mulf %27, %38 : vector<2x128xf32>
    %40 = arith.addf %36, %39 : vector<2x128xf32>
    %41 = math.tanh %40 : vector<2x128xf32>
    %cst_20 = arith.constant 1.000000e+00 : f32
    %42 = vector.broadcast %cst_20 : f32 to vector<2x128xf32>
    %43 = arith.subf %42, %35 : vector<2x128xf32>
    %44 = arith.mulf %43, %41 : vector<2x128xf32>
    %45 = arith.mulf %35, %10 : vector<2x128xf32>
    %46 = arith.addf %44, %45 : vector<2x128xf32>
    %c0_21 = arith.constant 0 : index
    %c1_22 = arith.constant 1 : index
    %47 = memref.load %arg0[%c0_21, %c1_22] : memref<2x8xi32, #tpu.memory_space<smem>>
    %48 = arith.index_cast %47 : i32 to index
    %c0_23 = arith.constant 0 : index
    %49 = vector.load %arg9[%48, %c0_23] : memref<32x384xf32, #tpu.memory_space<vmem>>, vector<1x384xf32>
    %c1_24 = arith.constant 1 : index
    %c1_25 = arith.constant 1 : index
    %50 = memref.load %arg0[%c1_24, %c1_25] : memref<2x8xi32, #tpu.memory_space<smem>>
    %51 = arith.index_cast %50 : i32 to index
    %c0_26 = arith.constant 0 : index
    %52 = vector.load %arg9[%51, %c0_26] : memref<32x384xf32, #tpu.memory_space<vmem>>, vector<1x384xf32>
    %53 = tpu.concatenate %49, %52 in 0 : vector<1x384xf32>, vector<1x384xf32> -> vector<2x384xf32>
    %c0_27 = arith.constant 0 : index
    %c0_28 = arith.constant 0 : index
    %54 = vector.load %arg3[%c0_27, %c0_28] : memref<128x384xf32, #tpu.memory_space<vmem>>, vector<128x384xf32>
    %cst_29 = arith.constant dense<0.000000e+00> : vector<2x384xf32>
    %55 = tpu.matmul %46, %54, %cst_29 {dimension_numbers = #tpu.dot_dimension_numbers<[1], [0], [0], [1], [0, 0, 1, 1], [], []>} : vector<2x128xf32>, vector<128x384xf32>, vector<2x384xf32> -> vector<2x384xf32>
    %56 = vector.extract_strided_slice %53 {offsets = [0, 0], sizes = [2, 128], strides = [1, 1]} : vector<2x384xf32> to vector<2x128xf32>
    %57 = vector.extract_strided_slice %55 {offsets = [0, 0], sizes = [2, 128], strides = [1, 1]} : vector<2x384xf32> to vector<2x128xf32>
    %58 = arith.addf %56, %57 : vector<2x128xf32>
    %59 = arith.negf %58 : vector<2x128xf32>
    %60 = math.exp %59 : vector<2x128xf32>
    %cst_30 = arith.constant 1.000000e+00 : f32
    %61 = vector.broadcast %cst_30 : f32 to vector<2x128xf32>
    %62 = arith.addf %61, %60 : vector<2x128xf32>
    %63 = arith.divf %61, %62 : vector<2x128xf32>
    %64 = vector.extract_strided_slice %53 {offsets = [0, 128], sizes = [2, 128], strides = [1, 1]} : vector<2x384xf32> to vector<2x128xf32>
    %65 = vector.extract_strided_slice %55 {offsets = [0, 128], sizes = [2, 128], strides = [1, 1]} : vector<2x384xf32> to vector<2x128xf32>
    %66 = arith.addf %64, %65 : vector<2x128xf32>
    %67 = arith.negf %66 : vector<2x128xf32>
    %68 = math.exp %67 : vector<2x128xf32>
    %cst_31 = arith.constant 1.000000e+00 : f32
    %69 = vector.broadcast %cst_31 : f32 to vector<2x128xf32>
    %70 = arith.addf %69, %68 : vector<2x128xf32>
    %71 = arith.divf %69, %70 : vector<2x128xf32>
    %72 = vector.extract_strided_slice %53 {offsets = [0, 256], sizes = [2, 128], strides = [1, 1]} : vector<2x384xf32> to vector<2x128xf32>
    %73 = vector.extract_strided_slice %55 {offsets = [0, 256], sizes = [2, 128], strides = [1, 1]} : vector<2x384xf32> to vector<2x128xf32>
    %74 = arith.addf %73, %9 : vector<2x128xf32>
    %75 = arith.mulf %63, %74 : vector<2x128xf32>
    %76 = arith.addf %72, %75 : vector<2x128xf32>
    %77 = math.tanh %76 : vector<2x128xf32>
    %cst_32 = arith.constant 1.000000e+00 : f32
    %78 = vector.broadcast %cst_32 : f32 to vector<2x128xf32>
    %79 = arith.subf %78, %71 : vector<2x128xf32>
    %80 = arith.mulf %79, %77 : vector<2x128xf32>
    %81 = arith.mulf %71, %46 : vector<2x128xf32>
    %82 = arith.addf %80, %81 : vector<2x128xf32>
    %c0_33 = arith.constant 0 : index
    %c2 = arith.constant 2 : index
    %83 = memref.load %arg0[%c0_33, %c2] : memref<2x8xi32, #tpu.memory_space<smem>>
    %84 = arith.index_cast %83 : i32 to index
    %c0_34 = arith.constant 0 : index
    %85 = vector.load %arg9[%84, %c0_34] : memref<32x384xf32, #tpu.memory_space<vmem>>, vector<1x384xf32>
    %c1_35 = arith.constant 1 : index
    %c2_36 = arith.constant 2 : index
    %86 = memref.load %arg0[%c1_35, %c2_36] : memref<2x8xi32, #tpu.memory_space<smem>>
    %87 = arith.index_cast %86 : i32 to index
    %c0_37 = arith.constant 0 : index
    %88 = vector.load %arg9[%87, %c0_37] : memref<32x384xf32, #tpu.memory_space<vmem>>, vector<1x384xf32>
    %89 = tpu.concatenate %85, %88 in 0 : vector<1x384xf32>, vector<1x384xf32> -> vector<2x384xf32>
    %c0_38 = arith.constant 0 : index
    %c0_39 = arith.constant 0 : index
    %90 = vector.load %arg3[%c0_38, %c0_39] : memref<128x384xf32, #tpu.memory_space<vmem>>, vector<128x384xf32>
    %cst_40 = arith.constant dense<0.000000e+00> : vector<2x384xf32>
    %91 = tpu.matmul %82, %90, %cst_40 {dimension_numbers = #tpu.dot_dimension_numbers<[1], [0], [0], [1], [0, 0, 1, 1], [], []>} : vector<2x128xf32>, vector<128x384xf32>, vector<2x384xf32> -> vector<2x384xf32>
    %92 = vector.extract_strided_slice %89 {offsets = [0, 0], sizes = [2, 128], strides = [1, 1]} : vector<2x384xf32> to vector<2x128xf32>
    %93 = vector.extract_strided_slice %91 {offsets = [0, 0], sizes = [2, 128], strides = [1, 1]} : vector<2x384xf32> to vector<2x128xf32>
    %94 = arith.addf %92, %93 : vector<2x128xf32>
    %95 = arith.negf %94 : vector<2x128xf32>
    %96 = math.exp %95 : vector<2x128xf32>
    %cst_41 = arith.constant 1.000000e+00 : f32
    %97 = vector.broadcast %cst_41 : f32 to vector<2x128xf32>
    %98 = arith.addf %97, %96 : vector<2x128xf32>
    %99 = arith.divf %97, %98 : vector<2x128xf32>
    %100 = vector.extract_strided_slice %89 {offsets = [0, 128], sizes = [2, 128], strides = [1, 1]} : vector<2x384xf32> to vector<2x128xf32>
    %101 = vector.extract_strided_slice %91 {offsets = [0, 128], sizes = [2, 128], strides = [1, 1]} : vector<2x384xf32> to vector<2x128xf32>
    %102 = arith.addf %100, %101 : vector<2x128xf32>
    %103 = arith.negf %102 : vector<2x128xf32>
    %104 = math.exp %103 : vector<2x128xf32>
    %cst_42 = arith.constant 1.000000e+00 : f32
    %105 = vector.broadcast %cst_42 : f32 to vector<2x128xf32>
    %106 = arith.addf %105, %104 : vector<2x128xf32>
    %107 = arith.divf %105, %106 : vector<2x128xf32>
    %108 = vector.extract_strided_slice %89 {offsets = [0, 256], sizes = [2, 128], strides = [1, 1]} : vector<2x384xf32> to vector<2x128xf32>
    %109 = vector.extract_strided_slice %91 {offsets = [0, 256], sizes = [2, 128], strides = [1, 1]} : vector<2x384xf32> to vector<2x128xf32>
    %110 = arith.addf %109, %9 : vector<2x128xf32>
    %111 = arith.mulf %99, %110 : vector<2x128xf32>
    %112 = arith.addf %108, %111 : vector<2x128xf32>
    %113 = math.tanh %112 : vector<2x128xf32>
    %cst_43 = arith.constant 1.000000e+00 : f32
    %114 = vector.broadcast %cst_43 : f32 to vector<2x128xf32>
    %115 = arith.subf %114, %107 : vector<2x128xf32>
    %116 = arith.mulf %115, %113 : vector<2x128xf32>
    %117 = arith.mulf %107, %82 : vector<2x128xf32>
    %118 = arith.addf %116, %117 : vector<2x128xf32>
    %c0_44 = arith.constant 0 : index
    %c3 = arith.constant 3 : index
    %119 = memref.load %arg0[%c0_44, %c3] : memref<2x8xi32, #tpu.memory_space<smem>>
    %120 = arith.index_cast %119 : i32 to index
    %c0_45 = arith.constant 0 : index
    %121 = vector.load %arg9[%120, %c0_45] : memref<32x384xf32, #tpu.memory_space<vmem>>, vector<1x384xf32>
    %c1_46 = arith.constant 1 : index
    %c3_47 = arith.constant 3 : index
    %122 = memref.load %arg0[%c1_46, %c3_47] : memref<2x8xi32, #tpu.memory_space<smem>>
    %123 = arith.index_cast %122 : i32 to index
    %c0_48 = arith.constant 0 : index
    %124 = vector.load %arg9[%123, %c0_48] : memref<32x384xf32, #tpu.memory_space<vmem>>, vector<1x384xf32>
    %125 = tpu.concatenate %121, %124 in 0 : vector<1x384xf32>, vector<1x384xf32> -> vector<2x384xf32>
    %c0_49 = arith.constant 0 : index
    %c0_50 = arith.constant 0 : index
    %126 = vector.load %arg3[%c0_49, %c0_50] : memref<128x384xf32, #tpu.memory_space<vmem>>, vector<128x384xf32>
    %cst_51 = arith.constant dense<0.000000e+00> : vector<2x384xf32>
    %127 = tpu.matmul %118, %126, %cst_51 {dimension_numbers = #tpu.dot_dimension_numbers<[1], [0], [0], [1], [0, 0, 1, 1], [], []>} : vector<2x128xf32>, vector<128x384xf32>, vector<2x384xf32> -> vector<2x384xf32>
    %128 = vector.extract_strided_slice %125 {offsets = [0, 0], sizes = [2, 128], strides = [1, 1]} : vector<2x384xf32> to vector<2x128xf32>
    %129 = vector.extract_strided_slice %127 {offsets = [0, 0], sizes = [2, 128], strides = [1, 1]} : vector<2x384xf32> to vector<2x128xf32>
    %130 = arith.addf %128, %129 : vector<2x128xf32>
    %131 = arith.negf %130 : vector<2x128xf32>
    %132 = math.exp %131 : vector<2x128xf32>
    %cst_52 = arith.constant 1.000000e+00 : f32
    %133 = vector.broadcast %cst_52 : f32 to vector<2x128xf32>
    %134 = arith.addf %133, %132 : vector<2x128xf32>
    %135 = arith.divf %133, %134 : vector<2x128xf32>
    %136 = vector.extract_strided_slice %125 {offsets = [0, 128], sizes = [2, 128], strides = [1, 1]} : vector<2x384xf32> to vector<2x128xf32>
    %137 = vector.extract_strided_slice %127 {offsets = [0, 128], sizes = [2, 128], strides = [1, 1]} : vector<2x384xf32> to vector<2x128xf32>
    %138 = arith.addf %136, %137 : vector<2x128xf32>
    %139 = arith.negf %138 : vector<2x128xf32>
    %140 = math.exp %139 : vector<2x128xf32>
    %cst_53 = arith.constant 1.000000e+00 : f32
    %141 = vector.broadcast %cst_53 : f32 to vector<2x128xf32>
    %142 = arith.addf %141, %140 : vector<2x128xf32>
    %143 = arith.divf %141, %142 : vector<2x128xf32>
    %144 = vector.extract_strided_slice %125 {offsets = [0, 256], sizes = [2, 128], strides = [1, 1]} : vector<2x384xf32> to vector<2x128xf32>
    %145 = vector.extract_strided_slice %127 {offsets = [0, 256], sizes = [2, 128], strides = [1, 1]} : vector<2x384xf32> to vector<2x128xf32>
    %146 = arith.addf %145, %9 : vector<2x128xf32>
    %147 = arith.mulf %135, %146 : vector<2x128xf32>
    %148 = arith.addf %144, %147 : vector<2x128xf32>
    %149 = math.tanh %148 : vector<2x128xf32>
    %cst_54 = arith.constant 1.000000e+00 : f32
    %150 = vector.broadcast %cst_54 : f32 to vector<2x128xf32>
    %151 = arith.subf %150, %143 : vector<2x128xf32>
    %152 = arith.mulf %151, %149 : vector<2x128xf32>
    %153 = arith.mulf %143, %118 : vector<2x128xf32>
    %154 = arith.addf %152, %153 : vector<2x128xf32>
    %c0_55 = arith.constant 0 : index
    %c4 = arith.constant 4 : index
    %155 = memref.load %arg0[%c0_55, %c4] : memref<2x8xi32, #tpu.memory_space<smem>>
    %156 = arith.index_cast %155 : i32 to index
    %c0_56 = arith.constant 0 : index
    %157 = vector.load %arg9[%156, %c0_56] : memref<32x384xf32, #tpu.memory_space<vmem>>, vector<1x384xf32>
    %c1_57 = arith.constant 1 : index
    %c4_58 = arith.constant 4 : index
    %158 = memref.load %arg0[%c1_57, %c4_58] : memref<2x8xi32, #tpu.memory_space<smem>>
    %159 = arith.index_cast %158 : i32 to index
    %c0_59 = arith.constant 0 : index
    %160 = vector.load %arg9[%159, %c0_59] : memref<32x384xf32, #tpu.memory_space<vmem>>, vector<1x384xf32>
    %161 = tpu.concatenate %157, %160 in 0 : vector<1x384xf32>, vector<1x384xf32> -> vector<2x384xf32>
    %c0_60 = arith.constant 0 : index
    %c0_61 = arith.constant 0 : index
    %162 = vector.load %arg3[%c0_60, %c0_61] : memref<128x384xf32, #tpu.memory_space<vmem>>, vector<128x384xf32>
    %cst_62 = arith.constant dense<0.000000e+00> : vector<2x384xf32>
    %163 = tpu.matmul %154, %162, %cst_62 {dimension_numbers = #tpu.dot_dimension_numbers<[1], [0], [0], [1], [0, 0, 1, 1], [], []>} : vector<2x128xf32>, vector<128x384xf32>, vector<2x384xf32> -> vector<2x384xf32>
    %164 = vector.extract_strided_slice %161 {offsets = [0, 0], sizes = [2, 128], strides = [1, 1]} : vector<2x384xf32> to vector<2x128xf32>
    %165 = vector.extract_strided_slice %163 {offsets = [0, 0], sizes = [2, 128], strides = [1, 1]} : vector<2x384xf32> to vector<2x128xf32>
    %166 = arith.addf %164, %165 : vector<2x128xf32>
    %167 = arith.negf %166 : vector<2x128xf32>
    %168 = math.exp %167 : vector<2x128xf32>
    %cst_63 = arith.constant 1.000000e+00 : f32
    %169 = vector.broadcast %cst_63 : f32 to vector<2x128xf32>
    %170 = arith.addf %169, %168 : vector<2x128xf32>
    %171 = arith.divf %169, %170 : vector<2x128xf32>
    %172 = vector.extract_strided_slice %161 {offsets = [0, 128], sizes = [2, 128], strides = [1, 1]} : vector<2x384xf32> to vector<2x128xf32>
    %173 = vector.extract_strided_slice %163 {offsets = [0, 128], sizes = [2, 128], strides = [1, 1]} : vector<2x384xf32> to vector<2x128xf32>
    %174 = arith.addf %172, %173 : vector<2x128xf32>
    %175 = arith.negf %174 : vector<2x128xf32>
    %176 = math.exp %175 : vector<2x128xf32>
    %cst_64 = arith.constant 1.000000e+00 : f32
    %177 = vector.broadcast %cst_64 : f32 to vector<2x128xf32>
    %178 = arith.addf %177, %176 : vector<2x128xf32>
    %179 = arith.divf %177, %178 : vector<2x128xf32>
    %180 = vector.extract_strided_slice %161 {offsets = [0, 256], sizes = [2, 128], strides = [1, 1]} : vector<2x384xf32> to vector<2x128xf32>
    %181 = vector.extract_strided_slice %163 {offsets = [0, 256], sizes = [2, 128], strides = [1, 1]} : vector<2x384xf32> to vector<2x128xf32>
    %182 = arith.addf %181, %9 : vector<2x128xf32>
    %183 = arith.mulf %171, %182 : vector<2x128xf32>
    %184 = arith.addf %180, %183 : vector<2x128xf32>
    %185 = math.tanh %184 : vector<2x128xf32>
    %cst_65 = arith.constant 1.000000e+00 : f32
    %186 = vector.broadcast %cst_65 : f32 to vector<2x128xf32>
    %187 = arith.subf %186, %179 : vector<2x128xf32>
    %188 = arith.mulf %187, %185 : vector<2x128xf32>
    %189 = arith.mulf %179, %154 : vector<2x128xf32>
    %190 = arith.addf %188, %189 : vector<2x128xf32>
    %c0_66 = arith.constant 0 : index
    %c5 = arith.constant 5 : index
    %191 = memref.load %arg0[%c0_66, %c5] : memref<2x8xi32, #tpu.memory_space<smem>>
    %192 = arith.index_cast %191 : i32 to index
    %c0_67 = arith.constant 0 : index
    %193 = vector.load %arg9[%192, %c0_67] : memref<32x384xf32, #tpu.memory_space<vmem>>, vector<1x384xf32>
    %c1_68 = arith.constant 1 : index
    %c5_69 = arith.constant 5 : index
    %194 = memref.load %arg0[%c1_68, %c5_69] : memref<2x8xi32, #tpu.memory_space<smem>>
    %195 = arith.index_cast %194 : i32 to index
    %c0_70 = arith.constant 0 : index
    %196 = vector.load %arg9[%195, %c0_70] : memref<32x384xf32, #tpu.memory_space<vmem>>, vector<1x384xf32>
    %197 = tpu.concatenate %193, %196 in 0 : vector<1x384xf32>, vector<1x384xf32> -> vector<2x384xf32>
    %c0_71 = arith.constant 0 : index
    %c0_72 = arith.constant 0 : index
    %198 = vector.load %arg3[%c0_71, %c0_72] : memref<128x384xf32, #tpu.memory_space<vmem>>, vector<128x384xf32>
    %cst_73 = arith.constant dense<0.000000e+00> : vector<2x384xf32>
    %199 = tpu.matmul %190, %198, %cst_73 {dimension_numbers = #tpu.dot_dimension_numbers<[1], [0], [0], [1], [0, 0, 1, 1], [], []>} : vector<2x128xf32>, vector<128x384xf32>, vector<2x384xf32> -> vector<2x384xf32>
    %200 = vector.extract_strided_slice %197 {offsets = [0, 0], sizes = [2, 128], strides = [1, 1]} : vector<2x384xf32> to vector<2x128xf32>
    %201 = vector.extract_strided_slice %199 {offsets = [0, 0], sizes = [2, 128], strides = [1, 1]} : vector<2x384xf32> to vector<2x128xf32>
    %202 = arith.addf %200, %201 : vector<2x128xf32>
    %203 = arith.negf %202 : vector<2x128xf32>
    %204 = math.exp %203 : vector<2x128xf32>
    %cst_74 = arith.constant 1.000000e+00 : f32
    %205 = vector.broadcast %cst_74 : f32 to vector<2x128xf32>
    %206 = arith.addf %205, %204 : vector<2x128xf32>
    %207 = arith.divf %205, %206 : vector<2x128xf32>
    %208 = vector.extract_strided_slice %197 {offsets = [0, 128], sizes = [2, 128], strides = [1, 1]} : vector<2x384xf32> to vector<2x128xf32>
    %209 = vector.extract_strided_slice %199 {offsets = [0, 128], sizes = [2, 128], strides = [1, 1]} : vector<2x384xf32> to vector<2x128xf32>
    %210 = arith.addf %208, %209 : vector<2x128xf32>
    %211 = arith.negf %210 : vector<2x128xf32>
    %212 = math.exp %211 : vector<2x128xf32>
    %cst_75 = arith.constant 1.000000e+00 : f32
    %213 = vector.broadcast %cst_75 : f32 to vector<2x128xf32>
    %214 = arith.addf %213, %212 : vector<2x128xf32>
    %215 = arith.divf %213, %214 : vector<2x128xf32>
    %216 = vector.extract_strided_slice %197 {offsets = [0, 256], sizes = [2, 128], strides = [1, 1]} : vector<2x384xf32> to vector<2x128xf32>
    %217 = vector.extract_strided_slice %199 {offsets = [0, 256], sizes = [2, 128], strides = [1, 1]} : vector<2x384xf32> to vector<2x128xf32>
    %218 = arith.addf %217, %9 : vector<2x128xf32>
    %219 = arith.mulf %207, %218 : vector<2x128xf32>
    %220 = arith.addf %216, %219 : vector<2x128xf32>
    %221 = math.tanh %220 : vector<2x128xf32>
    %cst_76 = arith.constant 1.000000e+00 : f32
    %222 = vector.broadcast %cst_76 : f32 to vector<2x128xf32>
    %223 = arith.subf %222, %215 : vector<2x128xf32>
    %224 = arith.mulf %223, %221 : vector<2x128xf32>
    %225 = arith.mulf %215, %190 : vector<2x128xf32>
    %226 = arith.addf %224, %225 : vector<2x128xf32>
    %c0_77 = arith.constant 0 : index
    %c6 = arith.constant 6 : index
    %227 = memref.load %arg0[%c0_77, %c6] : memref<2x8xi32, #tpu.memory_space<smem>>
    %228 = arith.index_cast %227 : i32 to index
    %c0_78 = arith.constant 0 : index
    %229 = vector.load %arg9[%228, %c0_78] : memref<32x384xf32, #tpu.memory_space<vmem>>, vector<1x384xf32>
    %c1_79 = arith.constant 1 : index
    %c6_80 = arith.constant 6 : index
    %230 = memref.load %arg0[%c1_79, %c6_80] : memref<2x8xi32, #tpu.memory_space<smem>>
    %231 = arith.index_cast %230 : i32 to index
    %c0_81 = arith.constant 0 : index
    %232 = vector.load %arg9[%231, %c0_81] : memref<32x384xf32, #tpu.memory_space<vmem>>, vector<1x384xf32>
    %233 = tpu.concatenate %229, %232 in 0 : vector<1x384xf32>, vector<1x384xf32> -> vector<2x384xf32>
    %c0_82 = arith.constant 0 : index
    %c0_83 = arith.constant 0 : index
    %234 = vector.load %arg3[%c0_82, %c0_83] : memref<128x384xf32, #tpu.memory_space<vmem>>, vector<128x384xf32>
    %cst_84 = arith.constant dense<0.000000e+00> : vector<2x384xf32>
    %235 = tpu.matmul %226, %234, %cst_84 {dimension_numbers = #tpu.dot_dimension_numbers<[1], [0], [0], [1], [0, 0, 1, 1], [], []>} : vector<2x128xf32>, vector<128x384xf32>, vector<2x384xf32> -> vector<2x384xf32>
    %236 = vector.extract_strided_slice %233 {offsets = [0, 0], sizes = [2, 128], strides = [1, 1]} : vector<2x384xf32> to vector<2x128xf32>
    %237 = vector.extract_strided_slice %235 {offsets = [0, 0], sizes = [2, 128], strides = [1, 1]} : vector<2x384xf32> to vector<2x128xf32>
    %238 = arith.addf %236, %237 : vector<2x128xf32>
    %239 = arith.negf %238 : vector<2x128xf32>
    %240 = math.exp %239 : vector<2x128xf32>
    %cst_85 = arith.constant 1.000000e+00 : f32
    %241 = vector.broadcast %cst_85 : f32 to vector<2x128xf32>
    %242 = arith.addf %241, %240 : vector<2x128xf32>
    %243 = arith.divf %241, %242 : vector<2x128xf32>
    %244 = vector.extract_strided_slice %233 {offsets = [0, 128], sizes = [2, 128], strides = [1, 1]} : vector<2x384xf32> to vector<2x128xf32>
    %245 = vector.extract_strided_slice %235 {offsets = [0, 128], sizes = [2, 128], strides = [1, 1]} : vector<2x384xf32> to vector<2x128xf32>
    %246 = arith.addf %244, %245 : vector<2x128xf32>
    %247 = arith.negf %246 : vector<2x128xf32>
    %248 = math.exp %247 : vector<2x128xf32>
    %cst_86 = arith.constant 1.000000e+00 : f32
    %249 = vector.broadcast %cst_86 : f32 to vector<2x128xf32>
    %250 = arith.addf %249, %248 : vector<2x128xf32>
    %251 = arith.divf %249, %250 : vector<2x128xf32>
    %252 = vector.extract_strided_slice %233 {offsets = [0, 256], sizes = [2, 128], strides = [1, 1]} : vector<2x384xf32> to vector<2x128xf32>
    %253 = vector.extract_strided_slice %235 {offsets = [0, 256], sizes = [2, 128], strides = [1, 1]} : vector<2x384xf32> to vector<2x128xf32>
    %254 = arith.addf %253, %9 : vector<2x128xf32>
    %255 = arith.mulf %243, %254 : vector<2x128xf32>
    %256 = arith.addf %252, %255 : vector<2x128xf32>
    %257 = math.tanh %256 : vector<2x128xf32>
    %cst_87 = arith.constant 1.000000e+00 : f32
    %258 = vector.broadcast %cst_87 : f32 to vector<2x128xf32>
    %259 = arith.subf %258, %251 : vector<2x128xf32>
    %260 = arith.mulf %259, %257 : vector<2x128xf32>
    %261 = arith.mulf %251, %226 : vector<2x128xf32>
    %262 = arith.addf %260, %261 : vector<2x128xf32>
    %c0_88 = arith.constant 0 : index
    %c7 = arith.constant 7 : index
    %263 = memref.load %arg0[%c0_88, %c7] : memref<2x8xi32, #tpu.memory_space<smem>>
    %264 = arith.index_cast %263 : i32 to index
    %c0_89 = arith.constant 0 : index
    %265 = vector.load %arg9[%264, %c0_89] : memref<32x384xf32, #tpu.memory_space<vmem>>, vector<1x384xf32>
    %c1_90 = arith.constant 1 : index
    %c7_91 = arith.constant 7 : index
    %266 = memref.load %arg0[%c1_90, %c7_91] : memref<2x8xi32, #tpu.memory_space<smem>>
    %267 = arith.index_cast %266 : i32 to index
    %c0_92 = arith.constant 0 : index
    %268 = vector.load %arg9[%267, %c0_92] : memref<32x384xf32, #tpu.memory_space<vmem>>, vector<1x384xf32>
    %269 = tpu.concatenate %265, %268 in 0 : vector<1x384xf32>, vector<1x384xf32> -> vector<2x384xf32>
    %c0_93 = arith.constant 0 : index
    %c0_94 = arith.constant 0 : index
    %270 = vector.load %arg3[%c0_93, %c0_94] : memref<128x384xf32, #tpu.memory_space<vmem>>, vector<128x384xf32>
    %cst_95 = arith.constant dense<0.000000e+00> : vector<2x384xf32>
    %271 = tpu.matmul %262, %270, %cst_95 {dimension_numbers = #tpu.dot_dimension_numbers<[1], [0], [0], [1], [0, 0, 1, 1], [], []>} : vector<2x128xf32>, vector<128x384xf32>, vector<2x384xf32> -> vector<2x384xf32>
    %272 = vector.extract_strided_slice %269 {offsets = [0, 0], sizes = [2, 128], strides = [1, 1]} : vector<2x384xf32> to vector<2x128xf32>
    %273 = vector.extract_strided_slice %271 {offsets = [0, 0], sizes = [2, 128], strides = [1, 1]} : vector<2x384xf32> to vector<2x128xf32>
    %274 = arith.addf %272, %273 : vector<2x128xf32>
    %275 = arith.negf %274 : vector<2x128xf32>
    %276 = math.exp %275 : vector<2x128xf32>
    %cst_96 = arith.constant 1.000000e+00 : f32
    %277 = vector.broadcast %cst_96 : f32 to vector<2x128xf32>
    %278 = arith.addf %277, %276 : vector<2x128xf32>
    %279 = arith.divf %277, %278 : vector<2x128xf32>
    %280 = vector.extract_strided_slice %269 {offsets = [0, 128], sizes = [2, 128], strides = [1, 1]} : vector<2x384xf32> to vector<2x128xf32>
    %281 = vector.extract_strided_slice %271 {offsets = [0, 128], sizes = [2, 128], strides = [1, 1]} : vector<2x384xf32> to vector<2x128xf32>
    %282 = arith.addf %280, %281 : vector<2x128xf32>
    %283 = arith.negf %282 : vector<2x128xf32>
    %284 = math.exp %283 : vector<2x128xf32>
    %cst_97 = arith.constant 1.000000e+00 : f32
    %285 = vector.broadcast %cst_97 : f32 to vector<2x128xf32>
    %286 = arith.addf %285, %284 : vector<2x128xf32>
    %287 = arith.divf %285, %286 : vector<2x128xf32>
    %288 = vector.extract_strided_slice %269 {offsets = [0, 256], sizes = [2, 128], strides = [1, 1]} : vector<2x384xf32> to vector<2x128xf32>
    %289 = vector.extract_strided_slice %271 {offsets = [0, 256], sizes = [2, 128], strides = [1, 1]} : vector<2x384xf32> to vector<2x128xf32>
    %290 = arith.addf %289, %9 : vector<2x128xf32>
    %291 = arith.mulf %279, %290 : vector<2x128xf32>
    %292 = arith.addf %288, %291 : vector<2x128xf32>
    %293 = math.tanh %292 : vector<2x128xf32>
    %cst_98 = arith.constant 1.000000e+00 : f32
    %294 = vector.broadcast %cst_98 : f32 to vector<2x128xf32>
    %295 = arith.subf %294, %287 : vector<2x128xf32>
    %296 = arith.mulf %295, %293 : vector<2x128xf32>
    %297 = arith.mulf %287, %262 : vector<2x128xf32>
    %298 = arith.addf %296, %297 : vector<2x128xf32>
    %c0_99 = arith.constant 0 : index
    %c0_100 = arith.constant 0 : index
    %299 = vector.load %arg6[%c0_99, %c0_100] : memref<128x128xf32, #tpu.memory_space<vmem>>, vector<128x128xf32>
    %cst_101 = arith.constant dense<0.000000e+00> : vector<2x128xf32>
    %300 = tpu.matmul %298, %299, %cst_101 {dimension_numbers = #tpu.dot_dimension_numbers<[1], [0], [0], [1], [0, 0, 1, 1], [], []>} : vector<2x128xf32>, vector<128x128xf32>, vector<2x128xf32> -> vector<2x128xf32>
    %c0_102 = arith.constant 0 : index
    %c0_103 = arith.constant 0 : index
    %301 = vector.load %arg7[%c0_102, %c0_103] : memref<1x128xf32, #tpu.memory_space<vmem>>, vector<1x128xf32>
    %302 = vector.broadcast %301 : vector<1x128xf32> to vector<2x128xf32>
    %303 = arith.addf %300, %302 : vector<2x128xf32>
    %cst_104 = arith.constant dense<0xFF800000> : vector<2xf32>
    %304 = vector.multi_reduction <maximumf>, %303, %cst_104 [1] : vector<2x128xf32> to vector<2xf32>
    %305 = vector.shape_cast %304 : vector<2xf32> to vector<2x1xf32>
    %306 = vector.broadcast %305 : vector<2x1xf32> to vector<2x128xf32>
    %307 = arith.subf %303, %306 : vector<2x128xf32>
    %308 = math.exp %307 : vector<2x128xf32>
    %cst_105 = arith.constant dense<0.000000e+00> : vector<2xf32>
    %309 = vector.multi_reduction <add>, %308, %cst_105 [1] : vector<2x128xf32> to vector<2xf32>
    %310 = vector.shape_cast %309 : vector<2xf32> to vector<2x1xf32>
    %311 = vector.broadcast %310 : vector<2x1xf32> to vector<2x128xf32>
    %312 = arith.divf %308, %311 : vector<2x128xf32>
    %c0_106 = arith.constant 0 : index
    %c0_107 = arith.constant 0 : index
    %313 = vector.load %arg8[%c0_106, %c0_107] : memref<2x128xf32, #tpu.memory_space<vmem>>, vector<2x128xf32>
    tpu.vector_store %arg8[%c0_106, %c0_107], %312 {strides = array<i32>} : memref<2x128xf32, #tpu.memory_space<vmem>>, vector<2x128xf32>,
    return
  }
}

</mosaic_0001>

<llo_original>
// kernel: rnn_classifier_forward.1
$region0: #{rnn_classifier_forward.1}
  #allocation0 [shape = 'u32[]', space=smem, size = 0x4, offset = 0x4, fixed_abs, tag = 'smem constant byte address 0x4 - core index']
  #allocation1 [shape = 'u32[144,128]{1,0:T(1,128)}', space=vmem, size = 0x12000, scoped, tag = 'internal scratch']
  #allocation2 [shape = 'f32[32,384]{1,0:T(8,128)}', space=vmem, size = 0xc000, scoped, tag = 'scratch operand']
  %s0 = inlined_call_operand.vmem [shape: s32[2,8], index: 0, kind: input, shape index: {}]
  %s1 = inlined_call_operand.vmem [shape: f32[32,16], index: 1, kind: input, shape index: {}]
  %s2 = inlined_call_operand.vmem [shape: f32[16,384], index: 2, kind: input, shape index: {}]
  %s3 = inlined_call_operand.hbm [shape: f32[128,384], index: 3, kind: input, shape index: {}]
  %s4 = inlined_call_operand.vmem [shape: f32[1,384], index: 4, kind: input, shape index: {}]
  %s5 = inlined_call_operand.vmem [shape: f32[1,128], index: 5, kind: input, shape index: {}]
  %s6 = inlined_call_operand.hbm [shape: f32[128,128], index: 6, kind: input, shape index: {}]
  %s7 = inlined_call_operand.vmem [shape: f32[1,128], index: 7, kind: input, shape index: {}]
  %s8 = inlined_call_operand.hbm [shape: f32[2,128], index: 8, kind: output, shape index: {}]
  %s9 = sld [smem:[#allocation0]]
  $region54: #{rnn_classifier_forward.1} parent=0
    _
  %s11 = ssub.s32 1, %s9
  %s12 = scalar_select 0, %s11, %s9
  $region1: #{rnn_classifier_forward.1} parent=0
    #allocation3 [shape = 'u8[1024]{0}', space=smem, size = 0x400, scoped, tag = 'input window, operand 0, single buffered']
    #allocation4 [shape = 's32[1]{0}', space=sflag, size = 0x4, scoped, tag = 'scoped memory for rnn_classifier_forward.1']
    #allocation5 [shape = 's32[1]{0}', space=sflag, size = 0x4, scoped, tag = 'scoped memory for rnn_classifier_forward.1']
    #allocation6 [shape = 's32[1]{0}', space=sflag, size = 0x4, scoped, tag = 'scoped memory for rnn_classifier_forward.1']
    #allocation7 [shape = 'u8[196608]{0}', space=vmem, size = 0x30000, scoped, tag = 'input window, operand 3, single buffered']
    #allocation8 [shape = 'u8[65536]{0}', space=vmem, size = 0x10000, scoped, tag = 'input window, operand 6, single buffered']
    #allocation9 [shape = 's32[1]{0}', space=sflag, size = 0x4, scoped, tag = 'scoped memory for rnn_classifier_forward.1']
    #allocation10 [shape = 'u8[1024]{0}', space=vmem, size = 0x400, scoped, tag = 'output window, operand 0, single buffered']
    %13 = vsyncpa [#allocation6], 0
    %14 = vsyncpa [#allocation4], 0
    %15 = vsyncpa [#allocation9], 0
    %16 = vsyncpa [#allocation5], 0
    // Predicated region
    $region2: #{rnn_classifier_forward.1} parent=1 // pred_check
      _
    $region3: #{rnn_classifier_forward.1} parent=1 // pred_check_branch
      %18 = sbr.rel (0) target = $region5
    $region4: #{rnn_classifier_forward.1} parent=1 // pred_region
      %s20 = ssub.s32 32, 32
      %21 = vsyncadd [#allocation6], %s20
      %s23 = sshll.u32 %s0, 4
      %s24 = int_to_ptr.vmem [resolvable:$true] %s23
      %26 = dma.vmem_to_smem %s24, 32, [#allocation3], [#allocation6]
    $region5: #{rnn_classifier_forward.1} parent=1 // pred_fallthru
      _
    // Predicated region
    $region6: #{rnn_classifier_forward.1} parent=1 // pred_check
      _
    $region7: #{rnn_classifier_forward.1} parent=1 // pred_check_branch
      %28 = sbr.rel (0) target = $region9
    $region8: #{rnn_classifier_forward.1} parent=1 // pred_region
      _
    $region9: #{rnn_classifier_forward.1} parent=1 // pred_fallthru
      _
    // Predicated region
    $region10: #{rnn_classifier_forward.1} parent=1 // pred_check
      _
    $region11: #{rnn_classifier_forward.1} parent=1 // pred_check_branch
      %30 = sbr.rel (0) target = $region13
    $region12: #{rnn_classifier_forward.1} parent=1 // pred_region
      _
    $region13: #{rnn_classifier_forward.1} parent=1 // pred_fallthru
      _
    // Predicated region
    $region14: #{rnn_classifier_forward.1} parent=1 // pred_check
      _
    $region15: #{rnn_classifier_forward.1} parent=1 // pred_check_branch
      %32 = sbr.rel (0) target = $region17
    $region16: #{rnn_classifier_forward.1} parent=1 // pred_region
      %s34 = ssub.s32 6144, 6144
      %35 = vsyncadd [#allocation4], %s34
      %s36 = sshll.u32 [#allocation7], 4
      %s37 = int_to_ptr.vmem [resolvable:$true] %s36
      %42 = dma.hbm_to_vmem [thread:$0]  %s3, 6144, %s37, [#allocation4], 384, 384, 24
    $region17: #{rnn_classifier_forward.1} parent=1 // pred_fallthru
      _
    // Predicated region
    $region18: #{rnn_classifier_forward.1} parent=1 // pred_check
      _
    $region19: #{rnn_classifier_forward.1} parent=1 // pred_check_branch
      %44 = sbr.rel (0) target = $region21
    $region20: #{rnn_classifier_forward.1} parent=1 // pred_region
      _
    $region21: #{rnn_classifier_forward.1} parent=1 // pred_fallthru
      _
    // Predicated region
    $region22: #{rnn_classifier_forward.1} parent=1 // pred_check
      _
    $region23: #{rnn_classifier_forward.1} parent=1 // pred_check_branch
      %46 = sbr.rel (0) target = $region25
    $region24: #{rnn_classifier_forward.1} parent=1 // pred_region
      _
    $region25: #{rnn_classifier_forward.1} parent=1 // pred_fallthru
      _
    // Predicated region
    $region26: #{rnn_classifier_forward.1} parent=1 // pred_check
      _
    $region27: #{rnn_classifier_forward.1} parent=1 // pred_check_branch
      %48 = sbr.rel (0) target = $region29
    $region28: #{rnn_classifier_forward.1} parent=1 // pred_region
      %s50 = ssub.s32 2048, 2048
      %51 = vsyncadd [#allocation9], %s50
      %s52 = sshll.u32 [#allocation8], 4
      %s53 = int_to_ptr.vmem [resolvable:$true] %s52
      %58 = dma.hbm_to_vmem [thread:$0]  %s6, 2048, %s53, [#allocation9], 128, 128, 8
    $region29: #{rnn_classifier_forward.1} parent=1 // pred_fallthru
      _
    // Predicated region
    $region30: #{rnn_classifier_forward.1} parent=1 // pred_check
      _
    $region31: #{rnn_classifier_forward.1} parent=1 // pred_check_branch
      %60 = sbr.rel (0) target = $region33
    $region32: #{rnn_classifier_forward.1} parent=1 // pred_region
      _
    $region33: #{rnn_classifier_forward.1} parent=1 // pred_fallthru
      _
    // Predicated region
    $region34: #{rnn_classifier_forward.1} parent=1 // pred_check
      _
    $region35: #{rnn_classifier_forward.1} parent=1 // pred_check_branch
      %62 = sbr.rel (0) target = $region37
    $region36: #{rnn_classifier_forward.1} parent=1 // pred_region
      %63 = dma.done [#allocation6], 32
    $region37: #{rnn_classifier_forward.1} parent=1 // pred_fallthru
      _
    // Predicated region
    $region38: #{rnn_classifier_forward.1} parent=1 // pred_check
      _
    $region39: #{rnn_classifier_forward.1} parent=1 // pred_check_branch
      %65 = sbr.rel (0) target = $region41
    $region40: #{rnn_classifier_forward.1} parent=1 // pred_region
      %66 = dma.done [#allocation4], 6144
    $region41: #{rnn_classifier_forward.1} parent=1 // pred_fallthru
      _
    // Predicated region
    $region42: #{rnn_classifier_forward.1} parent=1 // pred_check
      _
    $region43: #{rnn_classifier_forward.1} parent=1 // pred_check_branch
      %68 = sbr.rel (0) target = $region45
    $region44: #{rnn_classifier_forward.1} parent=1 // pred_region
      %69 = dma.done [#allocation9], 2048
    $region45: #{rnn_classifier_forward.1} parent=1 // pred_fallthru
      _
    %70 = sfence
    %v71 = vld [vmem:[%s1] sm:$0xff]
    %v72 = vld [vmem:[%s1 + $0x8] sm:$0xff]
    %v73 = vld [vmem:[%s1 + $0x10] sm:$0xff]
    %v74 = vld [vmem:[%s1 + $0x18] sm:$0xff]
    %v75 = vld [vmem:[%s2] sm:$0xff]
    %v76 = vld [vmem:[%s2 + $0x8] sm:$0xff]
    %v77 = vld [vmem:[%s2 + $0x10] sm:$0xff]
    %v78 = vld [vmem:[%s2 + $0x18] sm:$0xff]
    %v79 = vld [vmem:[%s2 + $0x20] sm:$0xff]
    %v80 = vld [vmem:[%s2 + $0x28] sm:$0xff]
    %v81 = vld [vmem:[%s4] sm:$0x7]
    %v83 = vlaneseq
    %v84 = vshrl.u32 %v83, 7
    %v85 = vsub.s32 0, %v84
    %v86 = vrot.slane %v81, %v85
    %v87 = vlaneseq
    %v88 = vshrl.u32 %v87, 7
    %v89 = vsub.s32 1, %v88
    %v90 = vrot.slane %v81, %v89
    %v91 = vlaneseq
    %v92 = vshrl.u32 %v91, 7
    %v93 = vsub.s32 2, %v92
    %v94 = vrot.slane %v81, %v93
    %vm98 = vcmask 130048
    %v100 = vsel %vm98, %v71, 0
    %v103 = vsel %vm98, %v72, 0
    %v106 = vsel %vm98, %v73, 0
    %v109 = vsel %vm98, %v74, 0
    %111 = vmatprep.subr.mxu0 %v76
    %112 = vmatpush1.msra.mxu0 %v75
    %113 = vmatprep.subr.mxu0 %v79
    %114 = vmatpush1.msra.mxu0 %v78
    %115 = vmatprep.subr.mxu0 0.0
    %116 = vmatpush1.msra.mxu0 0.0
    %117 = vmatprep.subr.mxu0 0.0
    %118 = vmatpush1.msra.mxu0 0.0
    %119 = vmatprep.subr.mxu0 0.0
    %120 = vmatpush1.msra.mxu0 0.0
    %121 = vmatprep.subr.mxu0 0.0
    %122 = vmatpush1.msra.mxu0 0.0
    %123 = vmatprep.subr.mxu0 0.0
    %124 = vmatpush1.msra.mxu0 0.0
    %125 = vmatprep.subr.mxu0 0.0
    %126 = vmatpush1.msra.mxu0 0.0
    %127 = vmatprep.subr.mxu0 0.0
    %128 = vmatpush1.msra.mxu0 0.0
    %129 = vmatprep.subr.mxu0 0.0
    %130 = vmatpush1.msra.mxu0 0.0
    %131 = vmatprep.subr.mxu0 0.0
    %132 = vmatpush1.msra.mxu0 0.0
    %133 = vmatprep.subr.mxu0 0.0
    %134 = vmatpush1.msra.mxu0 0.0
    %135 = vmatprep.subr.mxu0 0.0
    %136 = vmatpush1.msra.mxu0 0.0
    %137 = vmatprep.subr.mxu0 0.0
    %138 = vmatpush1.msra.mxu0 0.0
    %139 = vmatprep.subr.mxu0 0.0
    %140 = vmatpush1.msra.mxu0 0.0
    %141 = vmatprep.subr.mxu0 0.0
    %142 = vmatpush1.msra.mxu0 0.0
    %143 = vmatprep.subr.mxu0 0.0
    %144 = vmatpush1.msra.mxu0 0.0
    %145 = vmatprep.subr.mxu0 0.0
    %146 = vmatpush1.msra.mxu0 0.0
    %147 = vmatprep.subr.mxu0 0.0
    %148 = vmatpush1.msra.mxu0 0.0
    %149 = vmatprep.subr.mxu0 0.0
    %150 = vmatpush1.msra.mxu0 0.0
    %151 = vmatprep.subr.mxu0 0.0
    %152 = vmatpush1.msra.mxu0 0.0
    %153 = vmatprep.subr.mxu0 0.0
    %154 = vmatpush1.msra.mxu0 0.0
    %155 = vmatprep.subr.mxu0 0.0
    %156 = vmatpush1.msra.mxu0 0.0
    %157 = vmatprep.subr.mxu0 0.0
    %158 = vmatpush1.msra.mxu0 0.0
    %159 = vmatprep.subr.mxu0 0.0
    %160 = vmatpush1.msra.mxu0 0.0
    %161 = vmatprep.subr.mxu0 0.0
    %162 = vmatpush1.msra.mxu0 0.0
    %163 = vmatprep.subr.mxu0 0.0
    %164 = vmatpush1.msra.mxu0 0.0
    %165 = vmatprep.subr.mxu0 0.0
    %166 = vmatpush1.msra.mxu0 0.0
    %167 = vmatprep.subr.mxu0 0.0
    %168 = vmatpush1.msra.mxu0 0.0
    %169 = vmatprep.subr.mxu0 0.0
    %170 = vmatpush1.msra.mxu0 0.0
    %171 = vmatprep.subr.mxu0 0.0
    %172 = vmatpush1.msra.mxu0 0.0
    %173 = vmatprep.subr.mxu0 0.0
    %174 = vmatpush1.msra.mxu0 0.0
    %175 = vmatprep.mubr.f32.mxu0 0.0
    %176 = vmatmul.mubr.f32.gmra.mrb[0].mxu0 %v100
    %v177 = vpop.f32.mrb[0].mxu0
    %v178 = vadd.f32 %v86, %v177
    %v179 = vpop.f32.mrb[0].mxu0
    %v180 = vadd.f32 %v90, %v179
    %181 = vmatprep.mubr.f32.mxu0 0.0
    %182 = vmatmul.mubr.f32.gmra.mrb[0].mxu0 %v103
    %v183 = vpop.f32.mrb[0].mxu0
    %v184 = vadd.f32 %v86, %v183
    %v185 = vpop.f32.mrb[0].mxu0
    %v186 = vadd.f32 %v90, %v185
    %187 = vmatprep.mubr.f32.mxu0 0.0
    %188 = vmatmul.mubr.f32.gmra.mrb[0].mxu0 %v106
    %v189 = vpop.f32.mrb[0].mxu0
    %v190 = vadd.f32 %v86, %v189
    %v191 = vpop.f32.mrb[0].mxu0
    %v192 = vadd.f32 %v90, %v191
    %193 = vmatprep.mubr.f32.mxu0 0.0
    %194 = vmatmul.mubr.f32.gmra.mrb[0].mxu0 %v109
    %v195 = vpop.f32.mrb[0].mxu0
    %v196 = vadd.f32 %v86, %v195
    %v197 = vpop.f32.mrb[0].mxu0
    %v198 = vadd.f32 %v90, %v197
    %199 = vdwg.mxu0
    %200 = vmatprep.subr.mxu0 0.0
    %201 = vmatpush1.msra.mxu0 %v77
    %202 = vmatprep.subr.mxu0 0.0
    %203 = vmatpush1.msra.mxu0 %v80
    %204 = vmatprep.subr.mxu0 0.0
    %205 = vmatpush1.msra.mxu0 0.0
    %206 = vmatprep.subr.mxu0 0.0
    %207 = vmatpush1.msra.mxu0 0.0
    %208 = vmatprep.subr.mxu0 0.0
    %209 = vmatpush1.msra.mxu0 0.0
    %210 = vmatprep.subr.mxu0 0.0
    %211 = vmatpush1.msra.mxu0 0.0
    %212 = vmatprep.subr.mxu0 0.0
    %213 = vmatpush1.msra.mxu0 0.0
    %214 = vmatprep.subr.mxu0 0.0
    %215 = vmatpush1.msra.mxu0 0.0
    %216 = vmatprep.subr.mxu0 0.0
    %217 = vmatpush1.msra.mxu0 0.0
    %218 = vmatprep.subr.mxu0 0.0
    %219 = vmatpush1.msra.mxu0 0.0
    %220 = vmatprep.subr.mxu0 0.0
    %221 = vmatpush1.msra.mxu0 0.0
    %222 = vmatprep.subr.mxu0 0.0
    %223 = vmatpush1.msra.mxu0 0.0
    %224 = vmatprep.subr.mxu0 0.0
    %225 = vmatpush1.msra.mxu0 0.0
    %226 = vmatprep.subr.mxu0 0.0
    %227 = vmatpush1.msra.mxu0 0.0
    %228 = vmatprep.subr.mxu0 0.0
    %229 = vmatpush1.msra.mxu0 0.0
    %230 = vmatprep.subr.mxu0 0.0
    %231 = vmatpush1.msra.mxu0 0.0
    %232 = vmatprep.subr.mxu0 0.0
    %233 = vmatpush1.msra.mxu0 0.0
    %234 = vmatprep.subr.mxu0 0.0
    %235 = vmatpush1.msra.mxu0 0.0
    %236 = vmatprep.subr.mxu0 0.0
    %237 = vmatpush1.msra.mxu0 0.0
    %238 = vmatprep.subr.mxu0 0.0
    %239 = vmatpush1.msra.mxu0 0.0
    %240 = vmatprep.subr.mxu0 0.0
    %241 = vmatpush1.msra.mxu0 0.0
    %242 = vmatprep.subr.mxu0 0.0
    %243 = vmatpush1.msra.mxu0 0.0
    %244 = vmatprep.subr.mxu0 0.0
    %245 = vmatpush1.msra.mxu0 0.0
    %246 = vmatprep.subr.mxu0 0.0
    %247 = vmatpush1.msra.mxu0 0.0
    %248 = vmatprep.subr.mxu0 0.0
    %249 = vmatpush1.msra.mxu0 0.0
    %250 = vmatprep.subr.mxu0 0.0
    %251 = vmatpush1.msra.mxu0 0.0
    %252 = vmatprep.subr.mxu0 0.0
    %253 = vmatpush1.msra.mxu0 0.0
    %254 = vmatprep.subr.mxu0 0.0
    %255 = vmatpush1.msra.mxu0 0.0
    %256 = vmatprep.subr.mxu0 0.0
    %257 = vmatpush1.msra.mxu0 0.0
    %258 = vmatprep.subr.mxu0 0.0
    %259 = vmatpush1.msra.mxu0 0.0
    %260 = vmatprep.subr.mxu0 0.0
    %261 = vmatpush1.msra.mxu0 0.0
    %262 = vmatprep.subr.mxu0 0.0
    %263 = vmatpush1.msra.mxu0 0.0
    %264 = vmatprep.mubr.f32.mxu0 0.0
    %265 = vmatmul.mubr.f32.gmra.mrb[0].mxu0 %v100
    %v266 = vpop.f32.mrb[0].mxu0
    %v267 = vadd.f32 %v94, %v266
    %v268 = vpop.f32.mrb[0].mxu0
    %269 = vmatprep.mubr.f32.mxu0 0.0
    %270 = vmatmul.mubr.f32.gmra.mrb[0].mxu0 %v103
    %v271 = vpop.f32.mrb[0].mxu0
    %v272 = vadd.f32 %v94, %v271
    %v273 = vpop.f32.mrb[0].mxu0
    %274 = vmatprep.mubr.f32.mxu0 0.0
    %275 = vmatmul.mubr.f32.gmra.mrb[0].mxu0 %v106
    %v276 = vpop.f32.mrb[0].mxu0
    %v277 = vadd.f32 %v94, %v276
    %v278 = vpop.f32.mrb[0].mxu0
    %279 = vmatprep.mubr.f32.mxu0 0.0
    %280 = vmatmul.mubr.f32.gmra.mrb[0].mxu0 %v109
    %v281 = vpop.f32.mrb[0].mxu0
    %v282 = vadd.f32 %v94, %v281
    %v283 = vpop.f32.mrb[0].mxu0
    %284 = vdwg.mxu0
    %285 = vst [vmem:[#allocation2] sm:$0xff] %v178
    %286 = vst [vmem:[#allocation2 + $0x8] sm:$0xff] %v180
    %287 = vst [vmem:[#allocation2 + $0x10] sm:$0xff] %v267
    %288 = vst [vmem:[#allocation2 + $0x18] sm:$0xff] %v184
    %289 = vst [vmem:[#allocation2 + $0x20] sm:$0xff] %v186
    %290 = vst [vmem:[#allocation2 + $0x28] sm:$0xff] %v272
    %291 = vst [vmem:[#allocation2 + $0x30] sm:$0xff] %v190
    %292 = vst [vmem:[#allocation2 + $0x38] sm:$0xff] %v192
    %293 = vst [vmem:[#allocation2 + $0x40] sm:$0xff] %v277
    %294 = vst [vmem:[#allocation2 + $0x48] sm:$0xff] %v196
    %295 = vst [vmem:[#allocation2 + $0x50] sm:$0xff] %v198
    %296 = vst [vmem:[#allocation2 + $0x58] sm:$0xff] %v282
    %v297 = vld [vmem:[%s5] sm:$0x1]
    %v299 = vlaneseq
    %v300 = vshrl.u32 %v299, 7
    %v301 = vsub.s32 0, %v300
    %v302 = vrot.slane %v297, %v301
    %s304 = sld [smem:[#allocation3]]
    %s305 = sshra.s32 %s304, 3
    %s306 = sand.u32 %s304, 7
    %s307 = sshra.s32 %s304, 3
    %s308 = sand.u32 %s304, 7
    %s309 = smul.u32 %s305, 3
    %s310 = smul.u32 %s309, 8
    %s311 = sadd.s32 %s310, %s308
    %s312 = scalar_lea.vmem [#allocation2], %s311
    %v313 = vld [vmem:[%s312] ss:$8 sm:$0x7]
    %s314 = sld [smem:[#allocation3 + $0x80]]
    %s315 = sshra.s32 %s314, 3
    %s316 = sand.u32 %s314, 7
    %s317 = sshra.s32 %s314, 3
    %s318 = sand.u32 %s314, 7
    %s319 = smul.u32 %s315, 3
    %s320 = smul.u32 %s319, 8
    %s321 = sadd.s32 %s320, %s318
    %s322 = scalar_lea.vmem [#allocation2], %s321
    %v323 = vld [vmem:[%s322] ss:$8 sm:$0x7]
    %v325 = vlaneseq
    %v326 = vshrl.u32 %v325, 7
    %v327 = vsub.s32 0, %v326
    %v328 = vrot.slane %v313, %v327
    %v329 = vlaneseq
    %v330 = vshrl.u32 %v329, 7
    %v331 = vsub.s32 1, %v330
    %v332 = vrot.slane %v313, %v331
    %v333 = vlaneseq
    %v334 = vshrl.u32 %v333, 7
    %v335 = vsub.s32 2, %v334
    %v336 = vrot.slane %v313, %v335
    %v341 = vlaneseq
    %v342 = vshrl.u32 %v341, 7
    %v343 = vsub.s32 0, %v342
    %v344 = vrot.slane %v323, %v343
    %v345 = vlaneseq
    %v346 = vshrl.u32 %v345, 7
    %v347 = vsub.s32 1, %v346
    %v348 = vrot.slane %v323, %v347
    %v349 = vlaneseq
    %v350 = vshrl.u32 %v349, 7
    %v351 = vsub.s32 2, %v350
    %v352 = vrot.slane %v323, %v351
    %vm356 = vcmask 1040384
    %v357 = vsel %vm356, %v328, %v344
    %v358 = vsel %vm356, %v332, %v348
    %v359 = vsel %vm356, %v336, %v352
    %v360 = vld [vmem:[#allocation7] sm:$0xff]
    %v361 = vld [vmem:[#allocation7 + $0x8] sm:$0xff]
    %v362 = vld [vmem:[#allocation7 + $0x10] sm:$0xff]
    %v363 = vld [vmem:[#allocation7 + $0x18] sm:$0xff]
    %v364 = vld [vmem:[#allocation7 + $0x20] sm:$0xff]
    %v365 = vld [vmem:[#allocation7 + $0x28] sm:$0xff]
    %v366 = vld [vmem:[#allocation7 + $0x30] sm:$0xff]
    %v367 = vld [vmem:[#allocation7 + $0x38] sm:$0xff]
    %v368 = vld [vmem:[#allocation7 + $0x40] sm:$0xff]
    %v369 = vld [vmem:[#allocation7 + $0x48] sm:$0xff]
    %v370 = vld [vmem:[#allocation7 + $0x50] sm:$0xff]
    %v371 = vld [vmem:[#allocation7 + $0x58] sm:$0xff]
    %v372 = vld [vmem:[#allocation7 + $0x60] sm:$0xff]
    %v373 = vld [vmem:[#allocation7 + $0x68] sm:$0xff]
    %v374 = vld [vmem:[#allocation7 + $0x70] sm:$0xff]
    %v375 = vld [vmem:[#allocation7 + $0x78] sm:$0xff]
    %v376 = vld [vmem:[#allocation7 + $0x80] sm:$0xff]
    %v377 = vld [vmem:[#allocation7 + $0x88] sm:$0xff]
    %v378 = vld [vmem:[#allocation7 + $0x90] sm:$0xff]
    %v379 = vld [vmem:[#allocation7 + $0x98] sm:$0xff]
    %v380 = vld [vmem:[#allocation7 + $0xa0] sm:$0xff]
    %v381 = vld [vmem:[#allocation7 + $0xa8] sm:$0xff]
    %v382 = vld [vmem:[#allocation7 + $0xb0] sm:$0xff]
    %v383 = vld [vmem:[#allocation7 + $0xb8] sm:$0xff]
    %v384 = vld [vmem:[#allocation7 + $0xc0] sm:$0xff]
    %v385 = vld [vmem:[#allocation7 + $0xc8] sm:$0xff]
    %v386 = vld [vmem:[#allocation7 + $0xd0] sm:$0xff]
    %v387 = vld [vmem:[#allocation7 + $0xd8] sm:$0xff]
    %v388 = vld [vmem:[#allocation7 + $0xe0] sm:$0xff]
    %v389 = vld [vmem:[#allocation7 + $0xe8] sm:$0xff]
    %v390 = vld [vmem:[#allocation7 + $0xf0] sm:$0xff]
    %v391 = vld [vmem:[#allocation7 + $0xf8] sm:$0xff]
    %v392 = vld [vmem:[#allocation7 + $0x100] sm:$0xff]
    %v393 = vld [vmem:[#allocation7 + $0x108] sm:$0xff]
    %v394 = vld [vmem:[#allocation7 + $0x110] sm:$0xff]
    %v395 = vld [vmem:[#allocation7 + $0x118] sm:$0xff]
    %v396 = vld [vmem:[#allocation7 + $0x120] sm:$0xff]
    %v397 = vld [vmem:[#allocation7 + $0x128] sm:$0xff]
    %v398 = vld [vmem:[#allocation7 + $0x130] sm:$0xff]
    %v399 = vld [vmem:[#allocation7 + $0x138] sm:$0xff]
    %v400 = vld [vmem:[#allocation7 + $0x140] sm:$0xff]
    %v401 = vld [vmem:[#allocation7 + $0x148] sm:$0xff]
    %v402 = vld [vmem:[#allocation7 + $0x150] sm:$0xff]
    %v403 = vld [vmem:[#allocation7 + $0x158] sm:$0xff]
    %v404 = vld [vmem:[#allocation7 + $0x160] sm:$0xff]
    %v405 = vld [vmem:[#allocation7 + $0x168] sm:$0xff]
    %v406 = vld [vmem:[#allocation7 + $0x170] sm:$0xff]
    %v407 = vld [vmem:[#allocation7 + $0x178] sm:$0xff]
    %408 = vmatprep.subr.mxu0 %v361
    %409 = vmatpush1.msra.mxu0 %v360
    %410 = vmatprep.subr.mxu0 %v364
    %411 = vmatpush1.msra.mxu0 %v363
    %412 = vmatprep.subr.mxu0 %v367
    %413 = vmatpush1.msra.mxu0 %v366
    %414 = vmatprep.subr.mxu0 %v370
    %415 = vmatpush1.msra.mxu0 %v369
    %416 = vmatprep.subr.mxu0 %v373
    %417 = vmatpush1.msra.mxu0 %v372
    %418 = vmatprep.subr.mxu0 %v376
    %419 = vmatpush1.msra.mxu0 %v375
    %420 = vmatprep.subr.mxu0 %v379
    %421 = vmatpush1.msra.mxu0 %v378
    %422 = vmatprep.subr.mxu0 %v382
    %423 = vmatpush1.msra.mxu0 %v381
    %424 = vmatprep.subr.mxu0 %v385
    %425 = vmatpush1.msra.mxu0 %v384
    %426 = vmatprep.subr.mxu0 %v388
    %427 = vmatpush1.msra.mxu0 %v387
    %428 = vmatprep.subr.mxu0 %v391
    %429 = vmatpush1.msra.mxu0 %v390
    %430 = vmatprep.subr.mxu0 %v394
    %431 = vmatpush1.msra.mxu0 %v393
    %432 = vmatprep.subr.mxu0 %v397
    %433 = vmatpush1.msra.mxu0 %v396
    %434 = vmatprep.subr.mxu0 %v400
    %435 = vmatpush1.msra.mxu0 %v399
    %436 = vmatprep.subr.mxu0 %v403
    %437 = vmatpush1.msra.mxu0 %v402
    %438 = vmatprep.subr.mxu0 %v406
    %439 = vmatpush1.msra.mxu0 %v405
    %440 = vmatprep.subr.mxu0 0.0
    %441 = vmatpush1.msra.mxu0 0.0
    %442 = vmatprep.subr.mxu0 0.0
    %443 = vmatpush1.msra.mxu0 0.0
    %444 = vmatprep.subr.mxu0 0.0
    %445 = vmatpush1.msra.mxu0 0.0
    %446 = vmatprep.subr.mxu0 0.0
    %447 = vmatpush1.msra.mxu0 0.0
    %448 = vmatprep.subr.mxu0 0.0
    %449 = vmatpush1.msra.mxu0 0.0
    %450 = vmatprep.subr.mxu0 0.0
    %451 = vmatpush1.msra.mxu0 0.0
    %452 = vmatprep.subr.mxu0 0.0
    %453 = vmatpush1.msra.mxu0 0.0
    %454 = vmatprep.subr.mxu0 0.0
    %455 = vmatpush1.msra.mxu0 0.0
    %456 = vmatprep.subr.mxu0 0.0
    %457 = vmatpush1.msra.mxu0 0.0
    %458 = vmatprep.subr.mxu0 0.0
    %459 = vmatpush1.msra.mxu0 0.0
    %460 = vmatprep.subr.mxu0 0.0
    %461 = vmatpush1.msra.mxu0 0.0
    %462 = vmatprep.subr.mxu0 0.0
    %463 = vmatpush1.msra.mxu0 0.0
    %464 = vmatprep.subr.mxu0 0.0
    %465 = vmatpush1.msra.mxu0 0.0
    %466 = vmatprep.subr.mxu0 0.0
    %467 = vmatpush1.msra.mxu0 0.0
    %468 = vmatprep.subr.mxu0 0.0
    %469 = vmatpush1.msra.mxu0 0.0
    %470 = vmatprep.subr.mxu0 0.0
    %471 = vmatpush1.msra.mxu0 0.0
    %472 = vmatprep.mubr.f32.mxu0 0.0
    %473 = vmatmul.mubr.f32.gmra.mrb[0].mxu0 0.0
    %v474 = vpop.f32.mrb[0].mxu0
    %v475 = vadd.f32 0.0, %v474
    %v476 = vpop.f32.mrb[0].mxu0
    %v477 = vadd.f32 0.0, %v476
    %478 = vdwg.mxu0
    %479 = vmatprep.subr.mxu0 0.0
    %480 = vmatpush1.msra.mxu0 %v362
    %481 = vmatprep.subr.mxu0 0.0
    %482 = vmatpush1.msra.mxu0 %v365
    %483 = vmatprep.subr.mxu0 0.0
    %484 = vmatpush1.msra.mxu0 %v368
    %485 = vmatprep.subr.mxu0 0.0
    %486 = vmatpush1.msra.mxu0 %v371
    %487 = vmatprep.subr.mxu0 0.0
    %488 = vmatpush1.msra.mxu0 %v374
    %489 = vmatprep.subr.mxu0 0.0
    %490 = vmatpush1.msra.mxu0 %v377
    %491 = vmatprep.subr.mxu0 0.0
    %492 = vmatpush1.msra.mxu0 %v380
    %493 = vmatprep.subr.mxu0 0.0
    %494 = vmatpush1.msra.mxu0 %v383
    %495 = vmatprep.subr.mxu0 0.0
    %496 = vmatpush1.msra.mxu0 %v386
    %497 = vmatprep.subr.mxu0 0.0
    %498 = vmatpush1.msra.mxu0 %v389
    %499 = vmatprep.subr.mxu0 0.0
    %500 = vmatpush1.msra.mxu0 %v392
    %501 = vmatprep.subr.mxu0 0.0
    %502 = vmatpush1.msra.mxu0 %v395
    %503 = vmatprep.subr.mxu0 0.0
    %504 = vmatpush1.msra.mxu0 %v398
    %505 = vmatprep.subr.mxu0 0.0
    %506 = vmatpush1.msra.mxu0 %v401
    %507 = vmatprep.subr.mxu0 0.0
    %508 = vmatpush1.msra.mxu0 %v404
    %509 = vmatprep.subr.mxu0 0.0
    %510 = vmatpush1.msra.mxu0 %v407
    %511 = vmatprep.subr.mxu0 0.0
    %512 = vmatpush1.msra.mxu0 0.0
    %513 = vmatprep.subr.mxu0 0.0
    %514 = vmatpush1.msra.mxu0 0.0
    %515 = vmatprep.subr.mxu0 0.0
    %516 = vmatpush1.msra.mxu0 0.0
    %517 = vmatprep.subr.mxu0 0.0
    %518 = vmatpush1.msra.mxu0 0.0
    %519 = vmatprep.subr.mxu0 0.0
    %520 = vmatpush1.msra.mxu0 0.0
    %521 = vmatprep.subr.mxu0 0.0
    %522 = vmatpush1.msra.mxu0 0.0
    %523 = vmatprep.subr.mxu0 0.0
    %524 = vmatpush1.msra.mxu0 0.0
    %525 = vmatprep.subr.mxu0 0.0
    %526 = vmatpush1.msra.mxu0 0.0
    %527 = vmatprep.subr.mxu0 0.0
    %528 = vmatpush1.msra.mxu0 0.0
    %529 = vmatprep.subr.mxu0 0.0
    %530 = vmatpush1.msra.mxu0 0.0
    %531 = vmatprep.subr.mxu0 0.0
    %532 = vmatpush1.msra.mxu0 0.0
    %533 = vmatprep.subr.mxu0 0.0
    %534 = vmatpush1.msra.mxu0 0.0
    %535 = vmatprep.subr.mxu0 0.0
    %536 = vmatpush1.msra.mxu0 0.0
    %537 = vmatprep.subr.mxu0 0.0
    %538 = vmatpush1.msra.mxu0 0.0
    %539 = vmatprep.subr.mxu0 0.0
    %540 = vmatpush1.msra.mxu0 0.0
    %541 = vmatprep.subr.mxu0 0.0
    %542 = vmatpush1.msra.mxu0 0.0
    %543 = vmatprep.mubr.f32.mxu0 0.0
    %544 = vmatmul.mubr.f32.gmra.mrb[0].mxu0 0.0
    %v545 = vpop.f32.mrb[0].mxu0
    %v546 = vadd.f32 0.0, %v545
    %v547 = vpop.f32.mrb[0].mxu0
    %548 = vdwg.mxu0
    %v549 = vadd.f32 %v357, %v475
    %v550 = vxor.u32 %v549, 2147483648
    %v551 = vmul.f32 %v550, 1.442695
    %v552 = vpow.pop %v551
    %v553 = vadd.f32 %v552, 1.0
    %v554 = vrcp.pop %v553
    %v555 = vmul.f32 1.0, %v554
    %v556 = vadd.f32 %v358, %v477
    %v557 = vxor.u32 %v556, 2147483648
    %v558 = vmul.f32 %v557, 1.442695
    %v559 = vpow.pop %v558
    %v560 = vadd.f32 %v559, 1.0
    %v561 = vrcp.pop %v560
    %v562 = vmul.f32 1.0, %v561
    %v563 = vadd.f32 %v546, %v302
    %v564 = vmul.f32 %v555, %v563
    %v565 = vadd.f32 %v359, %v564
    %v566 = vtanh.pop %v565
    %v567 = vsub.f32 1.0, %v562
    %v568 = vmul.f32 %v567, %v566
    %v569 = vmul.f32 %v562, 0.0
    %v570 = vadd.f32 %v568, %v569
    %s571 = sld [smem:[#allocation3 + $0x1]]
    %s572 = sshra.s32 %s571, 3
    %s573 = sand.u32 %s571, 7
    %s574 = sshra.s32 %s571, 3
    %s575 = sand.u32 %s571, 7
    %s576 = smul.u32 %s572, 3
    %s577 = smul.u32 %s576, 8
    %s578 = sadd.s32 %s577, %s575
    %s579 = scalar_lea.vmem [#allocation2], %s578
    %v580 = vld [vmem:[%s579] ss:$8 sm:$0x7]
    %s581 = sld [smem:[#allocation3 + $0x81]]
    %s582 = sshra.s32 %s581, 3
    %s583 = sand.u32 %s581, 7
    %s584 = sshra.s32 %s581, 3
    %s585 = sand.u32 %s581, 7
    %s586 = smul.u32 %s582, 3
    %s587 = smul.u32 %s586, 8
    %s588 = sadd.s32 %s587, %s585
    %s589 = scalar_lea.vmem [#allocation2], %s588
    %v590 = vld [vmem:[%s589] ss:$8 sm:$0x7]
    %v592 = vlaneseq
    %v593 = vshrl.u32 %v592, 7
    %v594 = vsub.s32 0, %v593
    %v595 = vrot.slane %v580, %v594
    %v596 = vlaneseq
    %v597 = vshrl.u32 %v596, 7
    %v598 = vsub.s32 1, %v597
    %v599 = vrot.slane %v580, %v598
    %v600 = vlaneseq
    %v601 = vshrl.u32 %v600, 7
    %v602 = vsub.s32 2, %v601
    %v603 = vrot.slane %v580, %v602
    %v608 = vlaneseq
    %v609 = vshrl.u32 %v608, 7
    %v610 = vsub.s32 0, %v609
    %v611 = vrot.slane %v590, %v610
    %v612 = vlaneseq
    %v613 = vshrl.u32 %v612, 7
    %v614 = vsub.s32 1, %v613
    %v615 = vrot.slane %v590, %v614
    %v616 = vlaneseq
    %v617 = vshrl.u32 %v616, 7
    %v618 = vsub.s32 2, %v617
    %v619 = vrot.slane %v590, %v618
    %v623 = vsel %vm356, %v595, %v611
    %v624 = vsel %vm356, %v599, %v615
    %v625 = vsel %vm356, %v603, %v619
    %626 = vmatprep.subr.mxu0 %v361
    %627 = vmatpush1.msra.mxu0 %v360
    %628 = vmatprep.subr.mxu0 %v364
    %629 = vmatpush1.msra.mxu0 %v363
    %630 = vmatprep.subr.mxu0 %v367
    %631 = vmatpush1.msra.mxu0 %v366
    %632 = vmatprep.subr.mxu0 %v370
    %633 = vmatpush1.msra.mxu0 %v369
    %634 = vmatprep.subr.mxu0 %v373
    %635 = vmatpush1.msra.mxu0 %v372
    %636 = vmatprep.subr.mxu0 %v376
    %637 = vmatpush1.msra.mxu0 %v375
    %638 = vmatprep.subr.mxu0 %v379
    %639 = vmatpush1.msra.mxu0 %v378
    %640 = vmatprep.subr.mxu0 %v382
    %641 = vmatpush1.msra.mxu0 %v381
    %642 = vmatprep.subr.mxu0 %v385
    %643 = vmatpush1.msra.mxu0 %v384
    %644 = vmatprep.subr.mxu0 %v388
    %645 = vmatpush1.msra.mxu0 %v387
    %646 = vmatprep.subr.mxu0 %v391
    %647 = vmatpush1.msra.mxu0 %v390
    %648 = vmatprep.subr.mxu0 %v394
    %649 = vmatpush1.msra.mxu0 %v393
    %650 = vmatprep.subr.mxu0 %v397
    %651 = vmatpush1.msra.mxu0 %v396
    %652 = vmatprep.subr.mxu0 %v400
    %653 = vmatpush1.msra.mxu0 %v399
    %654 = vmatprep.subr.mxu0 %v403
    %655 = vmatpush1.msra.mxu0 %v402
    %656 = vmatprep.subr.mxu0 %v406
    %657 = vmatpush1.msra.mxu0 %v405
    %658 = vmatprep.subr.mxu0 0.0
    %659 = vmatpush1.msra.mxu0 0.0
    %660 = vmatprep.subr.mxu0 0.0
    %661 = vmatpush1.msra.mxu0 0.0
    %662 = vmatprep.subr.mxu0 0.0
    %663 = vmatpush1.msra.mxu0 0.0
    %664 = vmatprep.subr.mxu0 0.0
    %665 = vmatpush1.msra.mxu0 0.0
    %666 = vmatprep.subr.mxu0 0.0
    %667 = vmatpush1.msra.mxu0 0.0
    %668 = vmatprep.subr.mxu0 0.0
    %669 = vmatpush1.msra.mxu0 0.0
    %670 = vmatprep.subr.mxu0 0.0
    %671 = vmatpush1.msra.mxu0 0.0
    %672 = vmatprep.subr.mxu0 0.0
    %673 = vmatpush1.msra.mxu0 0.0
    %674 = vmatprep.subr.mxu0 0.0
    %675 = vmatpush1.msra.mxu0 0.0
    %676 = vmatprep.subr.mxu0 0.0
    %677 = vmatpush1.msra.mxu0 0.0
    %678 = vmatprep.subr.mxu0 0.0
    %679 = vmatpush1.msra.mxu0 0.0
    %680 = vmatprep.subr.mxu0 0.0
    %681 = vmatpush1.msra.mxu0 0.0
    %682 = vmatprep.subr.mxu0 0.0
    %683 = vmatpush1.msra.mxu0 0.0
    %684 = vmatprep.subr.mxu0 0.0
    %685 = vmatpush1.msra.mxu0 0.0
    %686 = vmatprep.subr.mxu0 0.0
    %687 = vmatpush1.msra.mxu0 0.0
    %688 = vmatprep.subr.mxu0 0.0
    %689 = vmatpush1.msra.mxu0 0.0
    %690 = vmatprep.mubr.f32.mxu0 0.0
    %691 = vmatmul.mubr.f32.gmra.mrb[0].mxu0 %v570
    %v692 = vpop.f32.mrb[0].mxu0
    %v693 = vadd.f32 0.0, %v692
    %v694 = vpop.f32.mrb[0].mxu0
    %v695 = vadd.f32 0.0, %v694
    %696 = vdwg.mxu0
    %697 = vmatprep.subr.mxu0 0.0
    %698 = vmatpush1.msra.mxu0 %v362
    %699 = vmatprep.subr.mxu0 0.0
    %700 = vmatpush1.msra.mxu0 %v365
    %701 = vmatprep.subr.mxu0 0.0
    %702 = vmatpush1.msra.mxu0 %v368
    %703 = vmatprep.subr.mxu0 0.0
    %704 = vmatpush1.msra.mxu0 %v371
    %705 = vmatprep.subr.mxu0 0.0
    %706 = vmatpush1.msra.mxu0 %v374
    %707 = vmatprep.subr.mxu0 0.0
    %708 = vmatpush1.msra.mxu0 %v377
    %709 = vmatprep.subr.mxu0 0.0
    %710 = vmatpush1.msra.mxu0 %v380
    %711 = vmatprep.subr.mxu0 0.0
    %712 = vmatpush1.msra.mxu0 %v383
    %713 = vmatprep.subr.mxu0 0.0
    %714 = vmatpush1.msra.mxu0 %v386
    %715 = vmatprep.subr.mxu0 0.0
    %716 = vmatpush1.msra.mxu0 %v389
    %717 = vmatprep.subr.mxu0 0.0
    %718 = vmatpush1.msra.mxu0 %v392
    %719 = vmatprep.subr.mxu0 0.0
    %720 = vmatpush1.msra.mxu0 %v395
    %721 = vmatprep.subr.mxu0 0.0
    %722 = vmatpush1.msra.mxu0 %v398
    %723 = vmatprep.subr.mxu0 0.0
    %724 = vmatpush1.msra.mxu0 %v401
    %725 = vmatprep.subr.mxu0 0.0
    %726 = vmatpush1.msra.mxu0 %v404
    %727 = vmatprep.subr.mxu0 0.0
    %728 = vmatpush1.msra.mxu0 %v407
    %729 = vmatprep.subr.mxu0 0.0
    %730 = vmatpush1.msra.mxu0 0.0
    %731 = vmatprep.subr.mxu0 0.0
    %732 = vmatpush1.msra.mxu0 0.0
    %733 = vmatprep.subr.mxu0 0.0
    %734 = vmatpush1.msra.mxu0 0.0
    %735 = vmatprep.subr.mxu0 0.0
    %736 = vmatpush1.msra.mxu0 0.0
    %737 = vmatprep.subr.mxu0 0.0
    %738 = vmatpush1.msra.mxu0 0.0
    %739 = vmatprep.subr.mxu0 0.0
    %740 = vmatpush1.msra.mxu0 0.0
    %741 = vmatprep.subr.mxu0 0.0
    %742 = vmatpush1.msra.mxu0 0.0
    %743 = vmatprep.subr.mxu0 0.0
    %744 = vmatpush1.msra.mxu0 0.0
    %745 = vmatprep.subr.mxu0 0.0
    %746 = vmatpush1.msra.mxu0 0.0
    %747 = vmatprep.subr.mxu0 0.0
    %748 = vmatpush1.msra.mxu0 0.0
    %749 = vmatprep.subr.mxu0 0.0
    %750 = vmatpush1.msra.mxu0 0.0
    %751 = vmatprep.subr.mxu0 0.0
    %752 = vmatpush1.msra.mxu0 0.0
    %753 = vmatprep.subr.mxu0 0.0
    %754 = vmatpush1.msra.mxu0 0.0
    %755 = vmatprep.subr.mxu0 0.0
    %756 = vmatpush1.msra.mxu0 0.0
    %757 = vmatprep.subr.mxu0 0.0
    %758 = vmatpush1.msra.mxu0 0.0
    %759 = vmatprep.subr.mxu0 0.0
    %760 = vmatpush1.msra.mxu0 0.0
    %761 = vmatprep.mubr.f32.mxu0 0.0
    %762 = vmatmul.mubr.f32.gmra.mrb[0].mxu0 %v570
    %v763 = vpop.f32.mrb[0].mxu0
    %v764 = vadd.f32 0.0, %v763
    %v765 = vpop.f32.mrb[0].mxu0
    %766 = vdwg.mxu0
    %v767 = vadd.f32 %v623, %v693
    %v768 = vxor.u32 %v767, 2147483648
    %v769 = vmul.f32 %v768, 1.442695
    %v770 = vpow.pop %v769
    %v771 = vadd.f32 %v770, 1.0
    %v772 = vrcp.pop %v771
    %v773 = vmul.f32 1.0, %v772
    %v774 = vadd.f32 %v624, %v695
    %v775 = vxor.u32 %v774, 2147483648
    %v776 = vmul.f32 %v775, 1.442695
    %v777 = vpow.pop %v776
    %v778 = vadd.f32 %v777, 1.0
    %v779 = vrcp.pop %v778
    %v780 = vmul.f32 1.0, %v779
    %v781 = vadd.f32 %v764, %v302
    %v782 = vmul.f32 %v773, %v781
    %v783 = vadd.f32 %v625, %v782
    %v784 = vtanh.pop %v783
    %v785 = vsub.f32 1.0, %v780
    %v786 = vmul.f32 %v785, %v784
    %v787 = vmul.f32 %v780, %v570
    %v788 = vadd.f32 %v786, %v787
    %s789 = sld [smem:[#allocation3 + $0x2]]
    %s790 = sshra.s32 %s789, 3
    %s791 = sand.u32 %s789, 7
    %s792 = sshra.s32 %s789, 3
    %s793 = sand.u32 %s789, 7
    %s794 = smul.u32 %s790, 3
    %s795 = smul.u32 %s794, 8
    %s796 = sadd.s32 %s795, %s793
    %s797 = scalar_lea.vmem [#allocation2], %s796
    %v798 = vld [vmem:[%s797] ss:$8 sm:$0x7]
    %s799 = sld [smem:[#allocation3 + $0x82]]
    %s800 = sshra.s32 %s799, 3
    %s801 = sand.u32 %s799, 7
    %s802 = sshra.s32 %s799, 3
    %s803 = sand.u32 %s799, 7
    %s804 = smul.u32 %s800, 3
    %s805 = smul.u32 %s804, 8
    %s806 = sadd.s32 %s805, %s803
    %s807 = scalar_lea.vmem [#allocation2], %s806
    %v808 = vld [vmem:[%s807] ss:$8 sm:$0x7]
    %v810 = vlaneseq
    %v811 = vshrl.u32 %v810, 7
    %v812 = vsub.s32 0, %v811
    %v813 = vrot.slane %v798, %v812
    %v814 = vlaneseq
    %v815 = vshrl.u32 %v814, 7
    %v816 = vsub.s32 1, %v815
    %v817 = vrot.slane %v798, %v816
    %v818 = vlaneseq
    %v819 = vshrl.u32 %v818, 7
    %v820 = vsub.s32 2, %v819
    %v821 = vrot.slane %v798, %v820
    %v826 = vlaneseq
    %v827 = vshrl.u32 %v826, 7
    %v828 = vsub.s32 0, %v827
    %v829 = vrot.slane %v808, %v828
    %v830 = vlaneseq
    %v831 = vshrl.u32 %v830, 7
    %v832 = vsub.s32 1, %v831
    %v833 = vrot.slane %v808, %v832
    %v834 = vlaneseq
    %v835 = vshrl.u32 %v834, 7
    %v836 = vsub.s32 2, %v835
    %v837 = vrot.slane %v808, %v836
    %v841 = vsel %vm356, %v813, %v829
    %v842 = vsel %vm356, %v817, %v833
    %v843 = vsel %vm356, %v821, %v837
    %844 = vmatprep.subr.mxu0 %v361
    %845 = vmatpush1.msra.mxu0 %v360
    %846 = vmatprep.subr.mxu0 %v364
    %847 = vmatpush1.msra.mxu0 %v363
    %848 = vmatprep.subr.mxu0 %v367
    %849 = vmatpush1.msra.mxu0 %v366
    %850 = vmatprep.subr.mxu0 %v370
    %851 = vmatpush1.msra.mxu0 %v369
    %852 = vmatprep.subr.mxu0 %v373
    %853 = vmatpush1.msra.mxu0 %v372
    %854 = vmatprep.subr.mxu0 %v376
    %855 = vmatpush1.msra.mxu0 %v375
    %856 = vmatprep.subr.mxu0 %v379
    %857 = vmatpush1.msra.mxu0 %v378
    %858 = vmatprep.subr.mxu0 %v382
    %859 = vmatpush1.msra.mxu0 %v381
    %860 = vmatprep.subr.mxu0 %v385
    %861 = vmatpush1.msra.mxu0 %v384
    %862 = vmatprep.subr.mxu0 %v388
    %863 = vmatpush1.msra.mxu0 %v387
    %864 = vmatprep.subr.mxu0 %v391
    %865 = vmatpush1.msra.mxu0 %v390
    %866 = vmatprep.subr.mxu0 %v394
    %867 = vmatpush1.msra.mxu0 %v393
    %868 = vmatprep.subr.mxu0 %v397
    %869 = vmatpush1.msra.mxu0 %v396
    %870 = vmatprep.subr.mxu0 %v400
    %871 = vmatpush1.msra.mxu0 %v399
    %872 = vmatprep.subr.mxu0 %v403
    %873 = vmatpush1.msra.mxu0 %v402
    %874 = vmatprep.subr.mxu0 %v406
    %875 = vmatpush1.msra.mxu0 %v405
    %876 = vmatprep.subr.mxu0 0.0
    %877 = vmatpush1.msra.mxu0 0.0
    %878 = vmatprep.subr.mxu0 0.0
    %879 = vmatpush1.msra.mxu0 0.0
    %880 = vmatprep.subr.mxu0 0.0
    %881 = vmatpush1.msra.mxu0 0.0
    %882 = vmatprep.subr.mxu0 0.0
    %883 = vmatpush1.msra.mxu0 0.0
    %884 = vmatprep.subr.mxu0 0.0
    %885 = vmatpush1.msra.mxu0 0.0
    %886 = vmatprep.subr.mxu0 0.0
    %887 = vmatpush1.msra.mxu0 0.0
    %888 = vmatprep.subr.mxu0 0.0
    %889 = vmatpush1.msra.mxu0 0.0
    %890 = vmatprep.subr.mxu0 0.0
    %891 = vmatpush1.msra.mxu0 0.0
    %892 = vmatprep.subr.mxu0 0.0
    %893 = vmatpush1.msra.mxu0 0.0
    %894 = vmatprep.subr.mxu0 0.0
    %895 = vmatpush1.msra.mxu0 0.0
    %896 = vmatprep.subr.mxu0 0.0
    %897 = vmatpush1.msra.mxu0 0.0
    %898 = vmatprep.subr.mxu0 0.0
    %899 = vmatpush1.msra.mxu0 0.0
    %900 = vmatprep.subr.mxu0 0.0
    %901 = vmatpush1.msra.mxu0 0.0
    %902 = vmatprep.subr.mxu0 0.0
    %903 = vmatpush1.msra.mxu0 0.0
    %904 = vmatprep.subr.mxu0 0.0
    %905 = vmatpush1.msra.mxu0 0.0
    %906 = vmatprep.subr.mxu0 0.0
    %907 = vmatpush1.msra.mxu0 0.0
    %908 = vmatprep.mubr.f32.mxu0 0.0
    %909 = vmatmul.mubr.f32.gmra.mrb[0].mxu0 %v788
    %v910 = vpop.f32.mrb[0].mxu0
    %v911 = vadd.f32 0.0, %v910
    %v912 = vpop.f32.mrb[0].mxu0
    %v913 = vadd.f32 0.0, %v912
    %914 = vdwg.mxu0
    %915 = vmatprep.subr.mxu0 0.0
    %916 = vmatpush1.msra.mxu0 %v362
    %917 = vmatprep.subr.mxu0 0.0
    %918 = vmatpush1.msra.mxu0 %v365
    %919 = vmatprep.subr.mxu0 0.0
    %920 = vmatpush1.msra.mxu0 %v368
    %921 = vmatprep.subr.mxu0 0.0
    %922 = vmatpush1.msra.mxu0 %v371
    %923 = vmatprep.subr.mxu0 0.0
    %924 = vmatpush1.msra.mxu0 %v374
    %925 = vmatprep.subr.mxu0 0.0
    %926 = vmatpush1.msra.mxu0 %v377
    %927 = vmatprep.subr.mxu0 0.0
    %928 = vmatpush1.msra.mxu0 %v380
    %929 = vmatprep.subr.mxu0 0.0
    %930 = vmatpush1.msra.mxu0 %v383
    %931 = vmatprep.subr.mxu0 0.0
    %932 = vmatpush1.msra.mxu0 %v386
    %933 = vmatprep.subr.mxu0 0.0
    %934 = vmatpush1.msra.mxu0 %v389
    %935 = vmatprep.subr.mxu0 0.0
    %936 = vmatpush1.msra.mxu0 %v392
    %937 = vmatprep.subr.mxu0 0.0
    %938 = vmatpush1.msra.mxu0 %v395
    %939 = vmatprep.subr.mxu0 0.0
    %940 = vmatpush1.msra.mxu0 %v398
    %941 = vmatprep.subr.mxu0 0.0
    %942 = vmatpush1.msra.mxu0 %v401
    %943 = vmatprep.subr.mxu0 0.0
    %944 = vmatpush1.msra.mxu0 %v404
    %945 = vmatprep.subr.mxu0 0.0
    %946 = vmatpush1.msra.mxu0 %v407
    %947 = vmatprep.subr.mxu0 0.0
    %948 = vmatpush1.msra.mxu0 0.0
    %949 = vmatprep.subr.mxu0 0.0
    %950 = vmatpush1.msra.mxu0 0.0
    %951 = vmatprep.subr.mxu0 0.0
    %952 = vmatpush1.msra.mxu0 0.0
    %953 = vmatprep.subr.mxu0 0.0
    %954 = vmatpush1.msra.mxu0 0.0
    %955 = vmatprep.subr.mxu0 0.0
    %956 = vmatpush1.msra.mxu0 0.0
    %957 = vmatprep.subr.mxu0 0.0
    %958 = vmatpush1.msra.mxu0 0.0
    %959 = vmatprep.subr.mxu0 0.0
    %960 = vmatpush1.msra.mxu0 0.0
    %961 = vmatprep.subr.mxu0 0.0
    %962 = vmatpush1.msra.mxu0 0.0
    %963 = vmatprep.subr.mxu0 0.0
    %964 = vmatpush1.msra.mxu0 0.0
    %965 = vmatprep.subr.mxu0 0.0
    %966 = vmatpush1.msra.mxu0 0.0
    %967 = vmatprep.subr.mxu0 0.0
    %968 = vmatpush1.msra.mxu0 0.0
    %969 = vmatprep.subr.mxu0 0.0
    %970 = vmatpush1.msra.mxu0 0.0
    %971 = vmatprep.subr.mxu0 0.0
    %972 = vmatpush1.msra.mxu0 0.0
    %973 = vmatprep.subr.mxu0 0.0
    %974 = vmatpush1.msra.mxu0 0.0
    %975 = vmatprep.subr.mxu0 0.0
    %976 = vmatpush1.msra.mxu0 0.0
    %977 = vmatprep.subr.mxu0 0.0
    %978 = vmatpush1.msra.mxu0 0.0
    %979 = vmatprep.mubr.f32.mxu0 0.0
    %980 = vmatmul.mubr.f32.gmra.mrb[0].mxu0 %v788
    %v981 = vpop.f32.mrb[0].mxu0
    %v982 = vadd.f32 0.0, %v981
    %v983 = vpop.f32.mrb[0].mxu0
    %984 = vdwg.mxu0
    %v985 = vadd.f32 %v841, %v911
    %v986 = vxor.u32 %v985, 2147483648
    %v987 = vmul.f32 %v986, 1.442695
    %v988 = vpow.pop %v987
    %v989 = vadd.f32 %v988, 1.0
    %v990 = vrcp.pop %v989
    %v991 = vmul.f32 1.0, %v990
    %v992 = vadd.f32 %v842, %v913
    %v993 = vxor.u32 %v992, 2147483648
    %v994 = vmul.f32 %v993, 1.442695
    %v995 = vpow.pop %v994
    %v996 = vadd.f32 %v995, 1.0
    %v997 = vrcp.pop %v996
    %v998 = vmul.f32 1.0, %v997
    %v999 = vadd.f32 %v982, %v302
    %v1000 = vmul.f32 %v991, %v999
    %v1001 = vadd.f32 %v843, %v1000
    %v1002 = vtanh.pop %v1001
    %v1003 = vsub.f32 1.0, %v998
    %v1004 = vmul.f32 %v1003, %v1002
    %v1005 = vmul.f32 %v998, %v788
    %v1006 = vadd.f32 %v1004, %v1005
    %s1007 = sld [smem:[#allocation3 + $0x3]]
    %s1008 = sshra.s32 %s1007, 3
    %s1009 = sand.u32 %s1007, 7
    %s1010 = sshra.s32 %s1007, 3
    %s1011 = sand.u32 %s1007, 7
    %s1012 = smul.u32 %s1008, 3
    %s1013 = smul.u32 %s1012, 8
    %s1014 = sadd.s32 %s1013, %s1011
    %s1015 = scalar_lea.vmem [#allocation2], %s1014
    %v1016 = vld [vmem:[%s1015] ss:$8 sm:$0x7]
    %s1017 = sld [smem:[#allocation3 + $0x83]]
    %s1018 = sshra.s32 %s1017, 3
    %s1019 = sand.u32 %s1017, 7
    %s1020 = sshra.s32 %s1017, 3
    %s1021 = sand.u32 %s1017, 7
    %s1022 = smul.u32 %s1018, 3
    %s1023 = smul.u32 %s1022, 8
    %s1024 = sadd.s32 %s1023, %s1021
    %s1025 = scalar_lea.vmem [#allocation2], %s1024
    %v1026 = vld [vmem:[%s1025] ss:$8 sm:$0x7]
    %v1028 = vlaneseq
    %v1029 = vshrl.u32 %v1028, 7
    %v1030 = vsub.s32 0, %v1029
    %v1031 = vrot.slane %v1016, %v1030
    %v1032 = vlaneseq
    %v1033 = vshrl.u32 %v1032, 7
    %v1034 = vsub.s32 1, %v1033
    %v1035 = vrot.slane %v1016, %v1034
    %v1036 = vlaneseq
    %v1037 = vshrl.u32 %v1036, 7
    %v1038 = vsub.s32 2, %v1037
    %v1039 = vrot.slane %v1016, %v1038
    %v1044 = vlaneseq
    %v1045 = vshrl.u32 %v1044, 7
    %v1046 = vsub.s32 0, %v1045
    %v1047 = vrot.slane %v1026, %v1046
    %v1048 = vlaneseq
    %v1049 = vshrl.u32 %v1048, 7
    %v1050 = vsub.s32 1, %v1049
    %v1051 = vrot.slane %v1026, %v1050
    %v1052 = vlaneseq
    %v1053 = vshrl.u32 %v1052, 7
    %v1054 = vsub.s32 2, %v1053
    %v1055 = vrot.slane %v1026, %v1054
    %v1059 = vsel %vm356, %v1031, %v1047
    %v1060 = vsel %vm356, %v1035, %v1051
    %v1061 = vsel %vm356, %v1039, %v1055
    %1062 = vmatprep.subr.mxu0 %v361
    %1063 = vmatpush1.msra.mxu0 %v360
    %1064 = vmatprep.subr.mxu0 %v364
    %1065 = vmatpush1.msra.mxu0 %v363
    %1066 = vmatprep.subr.mxu0 %v367
    %1067 = vmatpush1.msra.mxu0 %v366
    %1068 = vmatprep.subr.mxu0 %v370
    %1069 = vmatpush1.msra.mxu0 %v369
    %1070 = vmatprep.subr.mxu0 %v373
    %1071 = vmatpush1.msra.mxu0 %v372
    %1072 = vmatprep.subr.mxu0 %v376
    %1073 = vmatpush1.msra.mxu0 %v375
    %1074 = vmatprep.subr.mxu0 %v379
    %1075 = vmatpush1.msra.mxu0 %v378
    %1076 = vmatprep.subr.mxu0 %v382
    %1077 = vmatpush1.msra.mxu0 %v381
    %1078 = vmatprep.subr.mxu0 %v385
    %1079 = vmatpush1.msra.mxu0 %v384
    %1080 = vmatprep.subr.mxu0 %v388
    %1081 = vmatpush1.msra.mxu0 %v387
    %1082 = vmatprep.subr.mxu0 %v391
    %1083 = vmatpush1.msra.mxu0 %v390
    %1084 = vmatprep.subr.mxu0 %v394
    %1085 = vmatpush1.msra.mxu0 %v393
    %1086 = vmatprep.subr.mxu0 %v397
    %1087 = vmatpush1.msra.mxu0 %v396
    %1088 = vmatprep.subr.mxu0 %v400
    %1089 = vmatpush1.msra.mxu0 %v399
    %1090 = vmatprep.subr.mxu0 %v403
    %1091 = vmatpush1.msra.mxu0 %v402
    %1092 = vmatprep.subr.mxu0 %v406
    %1093 = vmatpush1.msra.mxu0 %v405
    %1094 = vmatprep.subr.mxu0 0.0
    %1095 = vmatpush1.msra.mxu0 0.0
    %1096 = vmatprep.subr.mxu0 0.0
    %1097 = vmatpush1.msra.mxu0 0.0
    %1098 = vmatprep.subr.mxu0 0.0
    %1099 = vmatpush1.msra.mxu0 0.0
    %1100 = vmatprep.subr.mxu0 0.0
    %1101 = vmatpush1.msra.mxu0 0.0
    %1102 = vmatprep.subr.mxu0 0.0
    %1103 = vmatpush1.msra.mxu0 0.0
    %1104 = vmatprep.subr.mxu0 0.0
    %1105 = vmatpush1.msra.mxu0 0.0
    %1106 = vmatprep.subr.mxu0 0.0
    %1107 = vmatpush1.msra.mxu0 0.0
    %1108 = vmatprep.subr.mxu0 0.0
    %1109 = vmatpush1.msra.mxu0 0.0
    %1110 = vmatprep.subr.mxu0 0.0
    %1111 = vmatpush1.msra.mxu0 0.0
    %1112 = vmatprep.subr.mxu0 0.0
    %1113 = vmatpush1.msra.mxu0 0.0
    %1114 = vmatprep.subr.mxu0 0.0
    %1115 = vmatpush1.msra.mxu0 0.0
    %1116 = vmatprep.subr.mxu0 0.0
    %1117 = vmatpush1.msra.mxu0 0.0
    %1118 = vmatprep.subr.mxu0 0.0
    %1119 = vmatpush1.msra.mxu0 0.0
    %1120 = vmatprep.subr.mxu0 0.0
    %1121 = vmatpush1.msra.mxu0 0.0
    %1122 = vmatprep.subr.mxu0 0.0
    %1123 = vmatpush1.msra.mxu0 0.0
    %1124 = vmatprep.subr.mxu0 0.0
    %1125 = vmatpush1.msra.mxu0 0.0
    %1126 = vmatprep.mubr.f32.mxu0 0.0
    %1127 = vmatmul.mubr.f32.gmra.mrb[0].mxu0 %v1006
    %v1128 = vpop.f32.mrb[0].mxu0
    %v1129 = vadd.f32 0.0, %v1128
    %v1130 = vpop.f32.mrb[0].mxu0
    %v1131 = vadd.f32 0.0, %v1130
    %1132 = vdwg.mxu0
    %1133 = vmatprep.subr.mxu0 0.0
    %1134 = vmatpush1.msra.mxu0 %v362
    %1135 = vmatprep.subr.mxu0 0.0
    %1136 = vmatpush1.msra.mxu0 %v365
    %1137 = vmatprep.subr.mxu0 0.0
    %1138 = vmatpush1.msra.mxu0 %v368
    %1139 = vmatprep.subr.mxu0 0.0
    %1140 = vmatpush1.msra.mxu0 %v371
    %1141 = vmatprep.subr.mxu0 0.0
    %1142 = vmatpush1.msra.mxu0 %v374
    %1143 = vmatprep.subr.mxu0 0.0
    %1144 = vmatpush1.msra.mxu0 %v377
    %1145 = vmatprep.subr.mxu0 0.0
    %1146 = vmatpush1.msra.mxu0 %v380
    %1147 = vmatprep.subr.mxu0 0.0
    %1148 = vmatpush1.msra.mxu0 %v383
    %1149 = vmatprep.subr.mxu0 0.0
    %1150 = vmatpush1.msra.mxu0 %v386
    %1151 = vmatprep.subr.mxu0 0.0
    %1152 = vmatpush1.msra.mxu0 %v389
    %1153 = vmatprep.subr.mxu0 0.0
    %1154 = vmatpush1.msra.mxu0 %v392
    %1155 = vmatprep.subr.mxu0 0.0
    %1156 = vmatpush1.msra.mxu0 %v395
    %1157 = vmatprep.subr.mxu0 0.0
    %1158 = vmatpush1.msra.mxu0 %v398
    %1159 = vmatprep.subr.mxu0 0.0
    %1160 = vmatpush1.msra.mxu0 %v401
    %1161 = vmatprep.subr.mxu0 0.0
    %1162 = vmatpush1.msra.mxu0 %v404
    %1163 = vmatprep.subr.mxu0 0.0
    %1164 = vmatpush1.msra.mxu0 %v407
    %1165 = vmatprep.subr.mxu0 0.0
    %1166 = vmatpush1.msra.mxu0 0.0
    %1167 = vmatprep.subr.mxu0 0.0
    %1168 = vmatpush1.msra.mxu0 0.0
    %1169 = vmatprep.subr.mxu0 0.0
    %1170 = vmatpush1.msra.mxu0 0.0
    %1171 = vmatprep.subr.mxu0 0.0
    %1172 = vmatpush1.msra.mxu0 0.0
    %1173 = vmatprep.subr.mxu0 0.0
    %1174 = vmatpush1.msra.mxu0 0.0
    %1175 = vmatprep.subr.mxu0 0.0
    %1176 = vmatpush1.msra.mxu0 0.0
    %1177 = vmatprep.subr.mxu0 0.0
    %1178 = vmatpush1.msra.mxu0 0.0
    %1179 = vmatprep.subr.mxu0 0.0
    %1180 = vmatpush1.msra.mxu0 0.0
    %1181 = vmatprep.subr.mxu0 0.0
    %1182 = vmatpush1.msra.mxu0 0.0
    %1183 = vmatprep.subr.mxu0 0.0
    %1184 = vmatpush1.msra.mxu0 0.0
    %1185 = vmatprep.subr.mxu0 0.0
    %1186 = vmatpush1.msra.mxu0 0.0
    %1187 = vmatprep.subr.mxu0 0.0
    %1188 = vmatpush1.msra.mxu0 0.0
    %1189 = vmatprep.subr.mxu0 0.0
    %1190 = vmatpush1.msra.mxu0 0.0
    %1191 = vmatprep.subr.mxu0 0.0
    %1192 = vmatpush1.msra.mxu0 0.0
    %1193 = vmatprep.subr.mxu0 0.0
    %1194 = vmatpush1.msra.mxu0 0.0
    %1195 = vmatprep.subr.mxu0 0.0
    %1196 = vmatpush1.msra.mxu0 0.0
    %1197 = vmatprep.mubr.f32.mxu0 0.0
    %1198 = vmatmul.mubr.f32.gmra.mrb[0].mxu0 %v1006
    %v1199 = vpop.f32.mrb[0].mxu0
    %v1200 = vadd.f32 0.0, %v1199
    %v1201 = vpop.f32.mrb[0].mxu0
    %1202 = vdwg.mxu0
    %v1203 = vadd.f32 %v1059, %v1129
    %v1204 = vxor.u32 %v1203, 2147483648
    %v1205 = vmul.f32 %v1204, 1.442695
    %v1206 = vpow.pop %v1205
    %v1207 = vadd.f32 %v1206, 1.0
    %v1208 = vrcp.pop %v1207
    %v1209 = vmul.f32 1.0, %v1208
    %v1210 = vadd.f32 %v1060, %v1131
    %v1211 = vxor.u32 %v1210, 2147483648
    %v1212 = vmul.f32 %v1211, 1.442695
    %v1213 = vpow.pop %v1212
    %v1214 = vadd.f32 %v1213, 1.0
    %v1215 = vrcp.pop %v1214
    %v1216 = vmul.f32 1.0, %v1215
    %v1217 = vadd.f32 %v1200, %v302
    %v1218 = vmul.f32 %v1209, %v1217
    %v1219 = vadd.f32 %v1061, %v1218
    %v1220 = vtanh.pop %v1219
    %v1221 = vsub.f32 1.0, %v1216
    %v1222 = vmul.f32 %v1221, %v1220
    %v1223 = vmul.f32 %v1216, %v1006
    %v1224 = vadd.f32 %v1222, %v1223
    %s1225 = sld [smem:[#allocation3 + $0x4]]
    %s1226 = sshra.s32 %s1225, 3
    %s1227 = sand.u32 %s1225, 7
    %s1228 = sshra.s32 %s1225, 3
    %s1229 = sand.u32 %s1225, 7
    %s1230 = smul.u32 %s1226, 3
    %s1231 = smul.u32 %s1230, 8
    %s1232 = sadd.s32 %s1231, %s1229
    %s1233 = scalar_lea.vmem [#allocation2], %s1232
    %v1234 = vld [vmem:[%s1233] ss:$8 sm:$0x7]
    %s1235 = sld [smem:[#allocation3 + $0x84]]
    %s1236 = sshra.s32 %s1235, 3
    %s1237 = sand.u32 %s1235, 7
    %s1238 = sshra.s32 %s1235, 3
    %s1239 = sand.u32 %s1235, 7
    %s1240 = smul.u32 %s1236, 3
    %s1241 = smul.u32 %s1240, 8
    %s1242 = sadd.s32 %s1241, %s1239
    %s1243 = scalar_lea.vmem [#allocation2], %s1242
    %v1244 = vld [vmem:[%s1243] ss:$8 sm:$0x7]
    %v1246 = vlaneseq
    %v1247 = vshrl.u32 %v1246, 7
    %v1248 = vsub.s32 0, %v1247
    %v1249 = vrot.slane %v1234, %v1248
    %v1250 = vlaneseq
    %v1251 = vshrl.u32 %v1250, 7
    %v1252 = vsub.s32 1, %v1251
    %v1253 = vrot.slane %v1234, %v1252
    %v1254 = vlaneseq
    %v1255 = vshrl.u32 %v1254, 7
    %v1256 = vsub.s32 2, %v1255
    %v1257 = vrot.slane %v1234, %v1256
    %v1262 = vlaneseq
    %v1263 = vshrl.u32 %v1262, 7
    %v1264 = vsub.s32 0, %v1263
    %v1265 = vrot.slane %v1244, %v1264
    %v1266 = vlaneseq
    %v1267 = vshrl.u32 %v1266, 7
    %v1268 = vsub.s32 1, %v1267
    %v1269 = vrot.slane %v1244, %v1268
    %v1270 = vlaneseq
    %v1271 = vshrl.u32 %v1270, 7
    %v1272 = vsub.s32 2, %v1271
    %v1273 = vrot.slane %v1244, %v1272
    %v1277 = vsel %vm356, %v1249, %v1265
    %v1278 = vsel %vm356, %v1253, %v1269
    %v1279 = vsel %vm356, %v1257, %v1273
    %1280 = vmatprep.subr.mxu0 %v361
    %1281 = vmatpush1.msra.mxu0 %v360
    %1282 = vmatprep.subr.mxu0 %v364
    %1283 = vmatpush1.msra.mxu0 %v363
    %1284 = vmatprep.subr.mxu0 %v367
    %1285 = vmatpush1.msra.mxu0 %v366
    %1286 = vmatprep.subr.mxu0 %v370
    %1287 = vmatpush1.msra.mxu0 %v369
    %1288 = vmatprep.subr.mxu0 %v373
    %1289 = vmatpush1.msra.mxu0 %v372
    %1290 = vmatprep.subr.mxu0 %v376
    %1291 = vmatpush1.msra.mxu0 %v375
    %1292 = vmatprep.subr.mxu0 %v379
    %1293 = vmatpush1.msra.mxu0 %v378
    %1294 = vmatprep.subr.mxu0 %v382
    %1295 = vmatpush1.msra.mxu0 %v381
    %1296 = vmatprep.subr.mxu0 %v385
    %1297 = vmatpush1.msra.mxu0 %v384
    %1298 = vmatprep.subr.mxu0 %v388
    %1299 = vmatpush1.msra.mxu0 %v387
    %1300 = vmatprep.subr.mxu0 %v391
    %1301 = vmatpush1.msra.mxu0 %v390
    %1302 = vmatprep.subr.mxu0 %v394
    %1303 = vmatpush1.msra.mxu0 %v393
    %1304 = vmatprep.subr.mxu0 %v397
    %1305 = vmatpush1.msra.mxu0 %v396
    %1306 = vmatprep.subr.mxu0 %v400
    %1307 = vmatpush1.msra.mxu0 %v399
    %1308 = vmatprep.subr.mxu0 %v403
    %1309 = vmatpush1.msra.mxu0 %v402
    %1310 = vmatprep.subr.mxu0 %v406
    %1311 = vmatpush1.msra.mxu0 %v405
    %1312 = vmatprep.subr.mxu0 0.0
    %1313 = vmatpush1.msra.mxu0 0.0
    %1314 = vmatprep.subr.mxu0 0.0
    %1315 = vmatpush1.msra.mxu0 0.0
    %1316 = vmatprep.subr.mxu0 0.0
    %1317 = vmatpush1.msra.mxu0 0.0
    %1318 = vmatprep.subr.mxu0 0.0
    %1319 = vmatpush1.msra.mxu0 0.0
    %1320 = vmatprep.subr.mxu0 0.0
    %1321 = vmatpush1.msra.mxu0 0.0
    %1322 = vmatprep.subr.mxu0 0.0
    %1323 = vmatpush1.msra.mxu0 0.0
    %1324 = vmatprep.subr.mxu0 0.0
    %1325 = vmatpush1.msra.mxu0 0.0
    %1326 = vmatprep.subr.mxu0 0.0
    %1327 = vmatpush1.msra.mxu0 0.0
    %1328 = vmatprep.subr.mxu0 0.0
    %1329 = vmatpush1.msra.mxu0 0.0
    %1330 = vmatprep.subr.mxu0 0.0
    %1331 = vmatpush1.msra.mxu0 0.0
    %1332 = vmatprep.subr.mxu0 0.0
    %1333 = vmatpush1.msra.mxu0 0.0
    %1334 = vmatprep.subr.mxu0 0.0
    %1335 = vmatpush1.msra.mxu0 0.0
    %1336 = vmatprep.subr.mxu0 0.0
    %1337 = vmatpush1.msra.mxu0 0.0
    %1338 = vmatprep.subr.mxu0 0.0
    %1339 = vmatpush1.msra.mxu0 0.0
    %1340 = vmatprep.subr.mxu0 0.0
    %1341 = vmatpush1.msra.mxu0 0.0
    %1342 = vmatprep.subr.mxu0 0.0
    %1343 = vmatpush1.msra.mxu0 0.0
    %1344 = vmatprep.mubr.f32.mxu0 0.0
    %1345 = vmatmul.mubr.f32.gmra.mrb[0].mxu0 %v1224
    %v1346 = vpop.f32.mrb[0].mxu0
    %v1347 = vadd.f32 0.0, %v1346
    %v1348 = vpop.f32.mrb[0].mxu0
    %v1349 = vadd.f32 0.0, %v1348
    %1350 = vdwg.mxu0
    %1351 = vmatprep.subr.mxu0 0.0
    %1352 = vmatpush1.msra.mxu0 %v362
    %1353 = vmatprep.subr.mxu0 0.0
    %1354 = vmatpush1.msra.mxu0 %v365
    %1355 = vmatprep.subr.mxu0 0.0
    %1356 = vmatpush1.msra.mxu0 %v368
    %1357 = vmatprep.subr.mxu0 0.0
    %1358 = vmatpush1.msra.mxu0 %v371
    %1359 = vmatprep.subr.mxu0 0.0
    %1360 = vmatpush1.msra.mxu0 %v374
    %1361 = vmatprep.subr.mxu0 0.0
    %1362 = vmatpush1.msra.mxu0 %v377
    %1363 = vmatprep.subr.mxu0 0.0
    %1364 = vmatpush1.msra.mxu0 %v380
    %1365 = vmatprep.subr.mxu0 0.0
    %1366 = vmatpush1.msra.mxu0 %v383
    %1367 = vmatprep.subr.mxu0 0.0
    %1368 = vmatpush1.msra.mxu0 %v386
    %1369 = vmatprep.subr.mxu0 0.0
    %1370 = vmatpush1.msra.mxu0 %v389
    %1371 = vmatprep.subr.mxu0 0.0
    %1372 = vmatpush1.msra.mxu0 %v392
    %1373 = vmatprep.subr.mxu0 0.0
    %1374 = vmatpush1.msra.mxu0 %v395
    %1375 = vmatprep.subr.mxu0 0.0
    %1376 = vmatpush1.msra.mxu0 %v398
    %1377 = vmatprep.subr.mxu0 0.0
    %1378 = vmatpush1.msra.mxu0 %v401
    %1379 = vmatprep.subr.mxu0 0.0
    %1380 = vmatpush1.msra.mxu0 %v404
    %1381 = vmatprep.subr.mxu0 0.0
    %1382 = vmatpush1.msra.mxu0 %v407
    %1383 = vmatprep.subr.mxu0 0.0
    %1384 = vmatpush1.msra.mxu0 0.0
    %1385 = vmatprep.subr.mxu0 0.0
    %1386 = vmatpush1.msra.mxu0 0.0
    %1387 = vmatprep.subr.mxu0 0.0
    %1388 = vmatpush1.msra.mxu0 0.0
    %1389 = vmatprep.subr.mxu0 0.0
    %1390 = vmatpush1.msra.mxu0 0.0
    %1391 = vmatprep.subr.mxu0 0.0
    %1392 = vmatpush1.msra.mxu0 0.0
    %1393 = vmatprep.subr.mxu0 0.0
    %1394 = vmatpush1.msra.mxu0 0.0
    %1395 = vmatprep.subr.mxu0 0.0
    %1396 = vmatpush1.msra.mxu0 0.0
    %1397 = vmatprep.subr.mxu0 0.0
    %1398 = vmatpush1.msra.mxu0 0.0
    %1399 = vmatprep.subr.mxu0 0.0
    %1400 = vmatpush1.msra.mxu0 0.0
    %1401 = vmatprep.subr.mxu0 0.0
    %1402 = vmatpush1.msra.mxu0 0.0
    %1403 = vmatprep.subr.mxu0 0.0
    %1404 = vmatpush1.msra.mxu0 0.0
    %1405 = vmatprep.subr.mxu0 0.0
    %1406 = vmatpush1.msra.mxu0 0.0
    %1407 = vmatprep.subr.mxu0 0.0
    %1408 = vmatpush1.msra.mxu0 0.0
    %1409 = vmatprep.subr.mxu0 0.0
    %1410 = vmatpush1.msra.mxu0 0.0
    %1411 = vmatprep.subr.mxu0 0.0
    %1412 = vmatpush1.msra.mxu0 0.0
    %1413 = vmatprep.subr.mxu0 0.0
    %1414 = vmatpush1.msra.mxu0 0.0
    %1415 = vmatprep.mubr.f32.mxu0 0.0
    %1416 = vmatmul.mubr.f32.gmra.mrb[0].mxu0 %v1224
    %v1417 = vpop.f32.mrb[0].mxu0
    %v1418 = vadd.f32 0.0, %v1417
    %v1419 = vpop.f32.mrb[0].mxu0
    %1420 = vdwg.mxu0
    %v1421 = vadd.f32 %v1277, %v1347
    %v1422 = vxor.u32 %v1421, 2147483648
    %v1423 = vmul.f32 %v1422, 1.442695
    %v1424 = vpow.pop %v1423
    %v1425 = vadd.f32 %v1424, 1.0
    %v1426 = vrcp.pop %v1425
    %v1427 = vmul.f32 1.0, %v1426
    %v1428 = vadd.f32 %v1278, %v1349
    %v1429 = vxor.u32 %v1428, 2147483648
    %v1430 = vmul.f32 %v1429, 1.442695
    %v1431 = vpow.pop %v1430
    %v1432 = vadd.f32 %v1431, 1.0
    %v1433 = vrcp.pop %v1432
    %v1434 = vmul.f32 1.0, %v1433
    %v1435 = vadd.f32 %v1418, %v302
    %v1436 = vmul.f32 %v1427, %v1435
    %v1437 = vadd.f32 %v1279, %v1436
    %v1438 = vtanh.pop %v1437
    %v1439 = vsub.f32 1.0, %v1434
    %v1440 = vmul.f32 %v1439, %v1438
    %v1441 = vmul.f32 %v1434, %v1224
    %v1442 = vadd.f32 %v1440, %v1441
    %s1443 = sld [smem:[#allocation3 + $0x5]]
    %s1444 = sshra.s32 %s1443, 3
    %s1445 = sand.u32 %s1443, 7
    %s1446 = sshra.s32 %s1443, 3
    %s1447 = sand.u32 %s1443, 7
    %s1448 = smul.u32 %s1444, 3
    %s1449 = smul.u32 %s1448, 8
    %s1450 = sadd.s32 %s1449, %s1447
    %s1451 = scalar_lea.vmem [#allocation2], %s1450
    %v1452 = vld [vmem:[%s1451] ss:$8 sm:$0x7]
    %s1453 = sld [smem:[#allocation3 + $0x85]]
    %s1454 = sshra.s32 %s1453, 3
    %s1455 = sand.u32 %s1453, 7
    %s1456 = sshra.s32 %s1453, 3
    %s1457 = sand.u32 %s1453, 7
    %s1458 = smul.u32 %s1454, 3
    %s1459 = smul.u32 %s1458, 8
    %s1460 = sadd.s32 %s1459, %s1457
    %s1461 = scalar_lea.vmem [#allocation2], %s1460
    %v1462 = vld [vmem:[%s1461] ss:$8 sm:$0x7]
    %v1464 = vlaneseq
    %v1465 = vshrl.u32 %v1464, 7
    %v1466 = vsub.s32 0, %v1465
    %v1467 = vrot.slane %v1452, %v1466
    %v1468 = vlaneseq
    %v1469 = vshrl.u32 %v1468, 7
    %v1470 = vsub.s32 1, %v1469
    %v1471 = vrot.slane %v1452, %v1470
    %v1472 = vlaneseq
    %v1473 = vshrl.u32 %v1472, 7
    %v1474 = vsub.s32 2, %v1473
    %v1475 = vrot.slane %v1452, %v1474
    %v1480 = vlaneseq
    %v1481 = vshrl.u32 %v1480, 7
    %v1482 = vsub.s32 0, %v1481
    %v1483 = vrot.slane %v1462, %v1482
    %v1484 = vlaneseq
    %v1485 = vshrl.u32 %v1484, 7
    %v1486 = vsub.s32 1, %v1485
    %v1487 = vrot.slane %v1462, %v1486
    %v1488 = vlaneseq
    %v1489 = vshrl.u32 %v1488, 7
    %v1490 = vsub.s32 2, %v1489
    %v1491 = vrot.slane %v1462, %v1490
    %v1495 = vsel %vm356, %v1467, %v1483
    %v1496 = vsel %vm356, %v1471, %v1487
    %v1497 = vsel %vm356, %v1475, %v1491
    %1498 = vmatprep.subr.mxu0 %v361
    %1499 = vmatpush1.msra.mxu0 %v360
    %1500 = vmatprep.subr.mxu0 %v364
    %1501 = vmatpush1.msra.mxu0 %v363
    %1502 = vmatprep.subr.mxu0 %v367
    %1503 = vmatpush1.msra.mxu0 %v366
    %1504 = vmatprep.subr.mxu0 %v370
    %1505 = vmatpush1.msra.mxu0 %v369
    %1506 = vmatprep.subr.mxu0 %v373
    %1507 = vmatpush1.msra.mxu0 %v372
    %1508 = vmatprep.subr.mxu0 %v376
    %1509 = vmatpush1.msra.mxu0 %v375
    %1510 = vmatprep.subr.mxu0 %v379
    %1511 = vmatpush1.msra.mxu0 %v378
    %1512 = vmatprep.subr.mxu0 %v382
    %1513 = vmatpush1.msra.mxu0 %v381
    %1514 = vmatprep.subr.mxu0 %v385
    %1515 = vmatpush1.msra.mxu0 %v384
    %1516 = vmatprep.subr.mxu0 %v388
    %1517 = vmatpush1.msra.mxu0 %v387
    %1518 = vmatprep.subr.mxu0 %v391
    %1519 = vmatpush1.msra.mxu0 %v390
    %1520 = vmatprep.subr.mxu0 %v394
    %1521 = vmatpush1.msra.mxu0 %v393
    %1522 = vmatprep.subr.mxu0 %v397
    %1523 = vmatpush1.msra.mxu0 %v396
    %1524 = vmatprep.subr.mxu0 %v400
    %1525 = vmatpush1.msra.mxu0 %v399
    %1526 = vmatprep.subr.mxu0 %v403
    %1527 = vmatpush1.msra.mxu0 %v402
    %1528 = vmatprep.subr.mxu0 %v406
    %1529 = vmatpush1.msra.mxu0 %v405
    %1530 = vmatprep.subr.mxu0 0.0
    %1531 = vmatpush1.msra.mxu0 0.0
    %1532 = vmatprep.subr.mxu0 0.0
    %1533 = vmatpush1.msra.mxu0 0.0
    %1534 = vmatprep.subr.mxu0 0.0
    %1535 = vmatpush1.msra.mxu0 0.0
    %1536 = vmatprep.subr.mxu0 0.0
    %1537 = vmatpush1.msra.mxu0 0.0
    %1538 = vmatprep.subr.mxu0 0.0
    %1539 = vmatpush1.msra.mxu0 0.0
    %1540 = vmatprep.subr.mxu0 0.0
    %1541 = vmatpush1.msra.mxu0 0.0
    %1542 = vmatprep.subr.mxu0 0.0
    %1543 = vmatpush1.msra.mxu0 0.0
    %1544 = vmatprep.subr.mxu0 0.0
    %1545 = vmatpush1.msra.mxu0 0.0
    %1546 = vmatprep.subr.mxu0 0.0
    %1547 = vmatpush1.msra.mxu0 0.0
    %1548 = vmatprep.subr.mxu0 0.0
    %1549 = vmatpush1.msra.mxu0 0.0
    %1550 = vmatprep.subr.mxu0 0.0
    %1551 = vmatpush1.msra.mxu0 0.0
    %1552 = vmatprep.subr.mxu0 0.0
    %1553 = vmatpush1.msra.mxu0 0.0
    %1554 = vmatprep.subr.mxu0 0.0
    %1555 = vmatpush1.msra.mxu0 0.0
    %1556 = vmatprep.subr.mxu0 0.0
    %1557 = vmatpush1.msra.mxu0 0.0
    %1558 = vmatprep.subr.mxu0 0.0
    %1559 = vmatpush1.msra.mxu0 0.0
    %1560 = vmatprep.subr.mxu0 0.0
    %1561 = vmatpush1.msra.mxu0 0.0
    %1562 = vmatprep.mubr.f32.mxu0 0.0
    %1563 = vmatmul.mubr.f32.gmra.mrb[0].mxu0 %v1442
    %v1564 = vpop.f32.mrb[0].mxu0
    %v1565 = vadd.f32 0.0, %v1564
    %v1566 = vpop.f32.mrb[0].mxu0
    %v1567 = vadd.f32 0.0, %v1566
    %1568 = vdwg.mxu0
    %1569 = vmatprep.subr.mxu0 0.0
    %1570 = vmatpush1.msra.mxu0 %v362
    %1571 = vmatprep.subr.mxu0 0.0
    %1572 = vmatpush1.msra.mxu0 %v365
    %1573 = vmatprep.subr.mxu0 0.0
    %1574 = vmatpush1.msra.mxu0 %v368
    %1575 = vmatprep.subr.mxu0 0.0
    %1576 = vmatpush1.msra.mxu0 %v371
    %1577 = vmatprep.subr.mxu0 0.0
    %1578 = vmatpush1.msra.mxu0 %v374
    %1579 = vmatprep.subr.mxu0 0.0
    %1580 = vmatpush1.msra.mxu0 %v377
    %1581 = vmatprep.subr.mxu0 0.0
    %1582 = vmatpush1.msra.mxu0 %v380
    %1583 = vmatprep.subr.mxu0 0.0
    %1584 = vmatpush1.msra.mxu0 %v383
    %1585 = vmatprep.subr.mxu0 0.0
    %1586 = vmatpush1.msra.mxu0 %v386
    %1587 = vmatprep.subr.mxu0 0.0
    %1588 = vmatpush1.msra.mxu0 %v389
    %1589 = vmatprep.subr.mxu0 0.0
    %1590 = vmatpush1.msra.mxu0 %v392
    %1591 = vmatprep.subr.mxu0 0.0
    %1592 = vmatpush1.msra.mxu0 %v395
    %1593 = vmatprep.subr.mxu0 0.0
    %1594 = vmatpush1.msra.mxu0 %v398
    %1595 = vmatprep.subr.mxu0 0.0
    %1596 = vmatpush1.msra.mxu0 %v401
    %1597 = vmatprep.subr.mxu0 0.0
    %1598 = vmatpush1.msra.mxu0 %v404
    %1599 = vmatprep.subr.mxu0 0.0
    %1600 = vmatpush1.msra.mxu0 %v407
    %1601 = vmatprep.subr.mxu0 0.0
    %1602 = vmatpush1.msra.mxu0 0.0
    %1603 = vmatprep.subr.mxu0 0.0
    %1604 = vmatpush1.msra.mxu0 0.0
    %1605 = vmatprep.subr.mxu0 0.0
    %1606 = vmatpush1.msra.mxu0 0.0
    %1607 = vmatprep.subr.mxu0 0.0
    %1608 = vmatpush1.msra.mxu0 0.0
    %1609 = vmatprep.subr.mxu0 0.0
    %1610 = vmatpush1.msra.mxu0 0.0
    %1611 = vmatprep.subr.mxu0 0.0
    %1612 = vmatpush1.msra.mxu0 0.0
    %1613 = vmatprep.subr.mxu0 0.0
    %1614 = vmatpush1.msra.mxu0 0.0
    %1615 = vmatprep.subr.mxu0 0.0
    %1616 = vmatpush1.msra.mxu0 0.0
    %1617 = vmatprep.subr.mxu0 0.0
    %1618 = vmatpush1.msra.mxu0 0.0
    %1619 = vmatprep.subr.mxu0 0.0
    %1620 = vmatpush1.msra.mxu0 0.0
    %1621 = vmatprep.subr.mxu0 0.0
    %1622 = vmatpush1.msra.mxu0 0.0
    %1623 = vmatprep.subr.mxu0 0.0
    %1624 = vmatpush1.msra.mxu0 0.0
    %1625 = vmatprep.subr.mxu0 0.0
    %1626 = vmatpush1.msra.mxu0 0.0
    %1627 = vmatprep.subr.mxu0 0.0
    %1628 = vmatpush1.msra.mxu0 0.0
    %1629 = vmatprep.subr.mxu0 0.0
    %1630 = vmatpush1.msra.mxu0 0.0
    %1631 = vmatprep.subr.mxu0 0.0
    %1632 = vmatpush1.msra.mxu0 0.0
    %1633 = vmatprep.mubr.f32.mxu0 0.0
    %1634 = vmatmul.mubr.f32.gmra.mrb[0].mxu0 %v1442
    %v1635 = vpop.f32.mrb[0].mxu0
    %v1636 = vadd.f32 0.0, %v1635
    %v1637 = vpop.f32.mrb[0].mxu0
    %1638 = vdwg.mxu0
    %v1639 = vadd.f32 %v1495, %v1565
    %v1640 = vxor.u32 %v1639, 2147483648
    %v1641 = vmul.f32 %v1640, 1.442695
    %v1642 = vpow.pop %v1641
    %v1643 = vadd.f32 %v1642, 1.0
    %v1644 = vrcp.pop %v1643
    %v1645 = vmul.f32 1.0, %v1644
    %v1646 = vadd.f32 %v1496, %v1567
    %v1647 = vxor.u32 %v1646, 2147483648
    %v1648 = vmul.f32 %v1647, 1.442695
    %v1649 = vpow.pop %v1648
    %v1650 = vadd.f32 %v1649, 1.0
    %v1651 = vrcp.pop %v1650
    %v1652 = vmul.f32 1.0, %v1651
    %v1653 = vadd.f32 %v1636, %v302
    %v1654 = vmul.f32 %v1645, %v1653
    %v1655 = vadd.f32 %v1497, %v1654
    %v1656 = vtanh.pop %v1655
    %v1657 = vsub.f32 1.0, %v1652
    %v1658 = vmul.f32 %v1657, %v1656
    %v1659 = vmul.f32 %v1652, %v1442
    %v1660 = vadd.f32 %v1658, %v1659
    %s1661 = sld [smem:[#allocation3 + $0x6]]
    %s1662 = sshra.s32 %s1661, 3
    %s1663 = sand.u32 %s1661, 7
    %s1664 = sshra.s32 %s1661, 3
    %s1665 = sand.u32 %s1661, 7
    %s1666 = smul.u32 %s1662, 3
    %s1667 = smul.u32 %s1666, 8
    %s1668 = sadd.s32 %s1667, %s1665
    %s1669 = scalar_lea.vmem [#allocation2], %s1668
    %v1670 = vld [vmem:[%s1669] ss:$8 sm:$0x7]
    %s1671 = sld [smem:[#allocation3 + $0x86]]
    %s1672 = sshra.s32 %s1671, 3
    %s1673 = sand.u32 %s1671, 7
    %s1674 = sshra.s32 %s1671, 3
    %s1675 = sand.u32 %s1671, 7
    %s1676 = smul.u32 %s1672, 3
    %s1677 = smul.u32 %s1676, 8
    %s1678 = sadd.s32 %s1677, %s1675
    %s1679 = scalar_lea.vmem [#allocation2], %s1678
    %v1680 = vld [vmem:[%s1679] ss:$8 sm:$0x7]
    %v1682 = vlaneseq
    %v1683 = vshrl.u32 %v1682, 7
    %v1684 = vsub.s32 0, %v1683
    %v1685 = vrot.slane %v1670, %v1684
    %v1686 = vlaneseq
    %v1687 = vshrl.u32 %v1686, 7
    %v1688 = vsub.s32 1, %v1687
    %v1689 = vrot.slane %v1670, %v1688
    %v1690 = vlaneseq
    %v1691 = vshrl.u32 %v1690, 7
    %v1692 = vsub.s32 2, %v1691
    %v1693 = vrot.slane %v1670, %v1692
    %v1698 = vlaneseq
    %v1699 = vshrl.u32 %v1698, 7
    %v1700 = vsub.s32 0, %v1699
    %v1701 = vrot.slane %v1680, %v1700
    %v1702 = vlaneseq
    %v1703 = vshrl.u32 %v1702, 7
    %v1704 = vsub.s32 1, %v1703
    %v1705 = vrot.slane %v1680, %v1704
    %v1706 = vlaneseq
    %v1707 = vshrl.u32 %v1706, 7
    %v1708 = vsub.s32 2, %v1707
    %v1709 = vrot.slane %v1680, %v1708
    %v1713 = vsel %vm356, %v1685, %v1701
    %v1714 = vsel %vm356, %v1689, %v1705
    %v1715 = vsel %vm356, %v1693, %v1709
    %1716 = vmatprep.subr.mxu0 %v361
    %1717 = vmatpush1.msra.mxu0 %v360
    %1718 = vmatprep.subr.mxu0 %v364
    %1719 = vmatpush1.msra.mxu0 %v363
    %1720 = vmatprep.subr.mxu0 %v367
    %1721 = vmatpush1.msra.mxu0 %v366
    %1722 = vmatprep.subr.mxu0 %v370
    %1723 = vmatpush1.msra.mxu0 %v369
    %1724 = vmatprep.subr.mxu0 %v373
    %1725 = vmatpush1.msra.mxu0 %v372
    %1726 = vmatprep.subr.mxu0 %v376
    %1727 = vmatpush1.msra.mxu0 %v375
    %1728 = vmatprep.subr.mxu0 %v379
    %1729 = vmatpush1.msra.mxu0 %v378
    %1730 = vmatprep.subr.mxu0 %v382
    %1731 = vmatpush1.msra.mxu0 %v381
    %1732 = vmatprep.subr.mxu0 %v385
    %1733 = vmatpush1.msra.mxu0 %v384
    %1734 = vmatprep.subr.mxu0 %v388
    %1735 = vmatpush1.msra.mxu0 %v387
    %1736 = vmatprep.subr.mxu0 %v391
    %1737 = vmatpush1.msra.mxu0 %v390
    %1738 = vmatprep.subr.mxu0 %v394
    %1739 = vmatpush1.msra.mxu0 %v393
    %1740 = vmatprep.subr.mxu0 %v397
    %1741 = vmatpush1.msra.mxu0 %v396
    %1742 = vmatprep.subr.mxu0 %v400
    %1743 = vmatpush1.msra.mxu0 %v399
    %1744 = vmatprep.subr.mxu0 %v403
    %1745 = vmatpush1.msra.mxu0 %v402
    %1746 = vmatprep.subr.mxu0 %v406
    %1747 = vmatpush1.msra.mxu0 %v405
    %1748 = vmatprep.subr.mxu0 0.0
    %1749 = vmatpush1.msra.mxu0 0.0
    %1750 = vmatprep.subr.mxu0 0.0
    %1751 = vmatpush1.msra.mxu0 0.0
    %1752 = vmatprep.subr.mxu0 0.0
    %1753 = vmatpush1.msra.mxu0 0.0
    %1754 = vmatprep.subr.mxu0 0.0
    %1755 = vmatpush1.msra.mxu0 0.0
    %1756 = vmatprep.subr.mxu0 0.0
    %1757 = vmatpush1.msra.mxu0 0.0
    %1758 = vmatprep.subr.mxu0 0.0
    %1759 = vmatpush1.msra.mxu0 0.0
    %1760 = vmatprep.subr.mxu0 0.0
    %1761 = vmatpush1.msra.mxu0 0.0
    %1762 = vmatprep.subr.mxu0 0.0
    %1763 = vmatpush1.msra.mxu0 0.0
    %1764 = vmatprep.subr.mxu0 0.0
    %1765 = vmatpush1.msra.mxu0 0.0
    %1766 = vmatprep.subr.mxu0 0.0
    %1767 = vmatpush1.msra.mxu0 0.0
    %1768 = vmatprep.subr.mxu0 0.0
    %1769 = vmatpush1.msra.mxu0 0.0
    %1770 = vmatprep.subr.mxu0 0.0
    %1771 = vmatpush1.msra.mxu0 0.0
    %1772 = vmatprep.subr.mxu0 0.0
    %1773 = vmatpush1.msra.mxu0 0.0
    %1774 = vmatprep.subr.mxu0 0.0
    %1775 = vmatpush1.msra.mxu0 0.0
    %1776 = vmatprep.subr.mxu0 0.0
    %1777 = vmatpush1.msra.mxu0 0.0
    %1778 = vmatprep.subr.mxu0 0.0
    %1779 = vmatpush1.msra.mxu0 0.0
    %1780 = vmatprep.mubr.f32.mxu0 0.0
    %1781 = vmatmul.mubr.f32.gmra.mrb[0].mxu0 %v1660
    %v1782 = vpop.f32.mrb[0].mxu0
    %v1783 = vadd.f32 0.0, %v1782
    %v1784 = vpop.f32.mrb[0].mxu0
    %v1785 = vadd.f32 0.0, %v1784
    %1786 = vdwg.mxu0
    %1787 = vmatprep.subr.mxu0 0.0
    %1788 = vmatpush1.msra.mxu0 %v362
    %1789 = vmatprep.subr.mxu0 0.0
    %1790 = vmatpush1.msra.mxu0 %v365
    %1791 = vmatprep.subr.mxu0 0.0
    %1792 = vmatpush1.msra.mxu0 %v368
    %1793 = vmatprep.subr.mxu0 0.0
    %1794 = vmatpush1.msra.mxu0 %v371
    %1795 = vmatprep.subr.mxu0 0.0
    %1796 = vmatpush1.msra.mxu0 %v374
    %1797 = vmatprep.subr.mxu0 0.0
    %1798 = vmatpush1.msra.mxu0 %v377
    %1799 = vmatprep.subr.mxu0 0.0
    %1800 = vmatpush1.msra.mxu0 %v380
    %1801 = vmatprep.subr.mxu0 0.0
    %1802 = vmatpush1.msra.mxu0 %v383
    %1803 = vmatprep.subr.mxu0 0.0
    %1804 = vmatpush1.msra.mxu0 %v386
    %1805 = vmatprep.subr.mxu0 0.0
    %1806 = vmatpush1.msra.mxu0 %v389
    %1807 = vmatprep.subr.mxu0 0.0
    %1808 = vmatpush1.msra.mxu0 %v392
    %1809 = vmatprep.subr.mxu0 0.0
    %1810 = vmatpush1.msra.mxu0 %v395
    %1811 = vmatprep.subr.mxu0 0.0
    %1812 = vmatpush1.msra.mxu0 %v398
    %1813 = vmatprep.subr.mxu0 0.0
    %1814 = vmatpush1.msra.mxu0 %v401
    %1815 = vmatprep.subr.mxu0 0.0
    %1816 = vmatpush1.msra.mxu0 %v404
    %1817 = vmatprep.subr.mxu0 0.0
    %1818 = vmatpush1.msra.mxu0 %v407
    %1819 = vmatprep.subr.mxu0 0.0
    %1820 = vmatpush1.msra.mxu0 0.0
    %1821 = vmatprep.subr.mxu0 0.0
    %1822 = vmatpush1.msra.mxu0 0.0
    %1823 = vmatprep.subr.mxu0 0.0
    %1824 = vmatpush1.msra.mxu0 0.0
    %1825 = vmatprep.subr.mxu0 0.0
    %1826 = vmatpush1.msra.mxu0 0.0
    %1827 = vmatprep.subr.mxu0 0.0
    %1828 = vmatpush1.msra.mxu0 0.0
    %1829 = vmatprep.subr.mxu0 0.0
    %1830 = vmatpush1.msra.mxu0 0.0
    %1831 = vmatprep.subr.mxu0 0.0
    %1832 = vmatpush1.msra.mxu0 0.0
    %1833 = vmatprep.subr.mxu0 0.0
    %1834 = vmatpush1.msra.mxu0 0.0
    %1835 = vmatprep.subr.mxu0 0.0
    %1836 = vmatpush1.msra.mxu0 0.0
    %1837 = vmatprep.subr.mxu0 0.0
    %1838 = vmatpush1.msra.mxu0 0.0
    %1839 = vmatprep.subr.mxu0 0.0
    %1840 = vmatpush1.msra.mxu0 0.0
    %1841 = vmatprep.subr.mxu0 0.0
    %1842 = vmatpush1.msra.mxu0 0.0
    %1843 = vmatprep.subr.mxu0 0.0
    %1844 = vmatpush1.msra.mxu0 0.0
    %1845 = vmatprep.subr.mxu0 0.0
    %1846 = vmatpush1.msra.mxu0 0.0
    %1847 = vmatprep.subr.mxu0 0.0
    %1848 = vmatpush1.msra.mxu0 0.0
    %1849 = vmatprep.subr.mxu0 0.0
    %1850 = vmatpush1.msra.mxu0 0.0
    %1851 = vmatprep.mubr.f32.mxu0 0.0
    %1852 = vmatmul.mubr.f32.gmra.mrb[0].mxu0 %v1660
    %v1853 = vpop.f32.mrb[0].mxu0
    %v1854 = vadd.f32 0.0, %v1853
    %v1855 = vpop.f32.mrb[0].mxu0
    %1856 = vdwg.mxu0
    %v1857 = vadd.f32 %v1713, %v1783
    %v1858 = vxor.u32 %v1857, 2147483648
    %v1859 = vmul.f32 %v1858, 1.442695
    %v1860 = vpow.pop %v1859
    %v1861 = vadd.f32 %v1860, 1.0
    %v1862 = vrcp.pop %v1861
    %v1863 = vmul.f32 1.0, %v1862
    %v1864 = vadd.f32 %v1714, %v1785
    %v1865 = vxor.u32 %v1864, 2147483648
    %v1866 = vmul.f32 %v1865, 1.442695
    %v1867 = vpow.pop %v1866
    %v1868 = vadd.f32 %v1867, 1.0
    %v1869 = vrcp.pop %v1868
    %v1870 = vmul.f32 1.0, %v1869
    %v1871 = vadd.f32 %v1854, %v302
    %v1872 = vmul.f32 %v1863, %v1871
    %v1873 = vadd.f32 %v1715, %v1872
    %v1874 = vtanh.pop %v1873
    %v1875 = vsub.f32 1.0, %v1870
    %v1876 = vmul.f32 %v1875, %v1874
    %v1877 = vmul.f32 %v1870, %v1660
    %v1878 = vadd.f32 %v1876, %v1877
    %s1879 = sld [smem:[#allocation3 + $0x7]]
    %s1880 = sshra.s32 %s1879, 3
    %s1881 = sand.u32 %s1879, 7
    %s1882 = sshra.s32 %s1879, 3
    %s1883 = sand.u32 %s1879, 7
    %s1884 = smul.u32 %s1880, 3
    %s1885 = smul.u32 %s1884, 8
    %s1886 = sadd.s32 %s1885, %s1883
    %s1887 = scalar_lea.vmem [#allocation2], %s1886
    %v1888 = vld [vmem:[%s1887] ss:$8 sm:$0x7]
    %s1889 = sld [smem:[#allocation3 + $0x87]]
    %s1890 = sshra.s32 %s1889, 3
    %s1891 = sand.u32 %s1889, 7
    %s1892 = sshra.s32 %s1889, 3
    %s1893 = sand.u32 %s1889, 7
    %s1894 = smul.u32 %s1890, 3
    %s1895 = smul.u32 %s1894, 8
    %s1896 = sadd.s32 %s1895, %s1893
    %s1897 = scalar_lea.vmem [#allocation2], %s1896
    %v1898 = vld [vmem:[%s1897] ss:$8 sm:$0x7]
    %v1900 = vlaneseq
    %v1901 = vshrl.u32 %v1900, 7
    %v1902 = vsub.s32 0, %v1901
    %v1903 = vrot.slane %v1888, %v1902
    %v1904 = vlaneseq
    %v1905 = vshrl.u32 %v1904, 7
    %v1906 = vsub.s32 1, %v1905
    %v1907 = vrot.slane %v1888, %v1906
    %v1908 = vlaneseq
    %v1909 = vshrl.u32 %v1908, 7
    %v1910 = vsub.s32 2, %v1909
    %v1911 = vrot.slane %v1888, %v1910
    %v1916 = vlaneseq
    %v1917 = vshrl.u32 %v1916, 7
    %v1918 = vsub.s32 0, %v1917
    %v1919 = vrot.slane %v1898, %v1918
    %v1920 = vlaneseq
    %v1921 = vshrl.u32 %v1920, 7
    %v1922 = vsub.s32 1, %v1921
    %v1923 = vrot.slane %v1898, %v1922
    %v1924 = vlaneseq
    %v1925 = vshrl.u32 %v1924, 7
    %v1926 = vsub.s32 2, %v1925
    %v1927 = vrot.slane %v1898, %v1926
    %v1931 = vsel %vm356, %v1903, %v1919
    %v1932 = vsel %vm356, %v1907, %v1923
    %v1933 = vsel %vm356, %v1911, %v1927
    %1934 = vmatprep.subr.mxu0 %v361
    %1935 = vmatpush1.msra.mxu0 %v360
    %1936 = vmatprep.subr.mxu0 %v364
    %1937 = vmatpush1.msra.mxu0 %v363
    %1938 = vmatprep.subr.mxu0 %v367
    %1939 = vmatpush1.msra.mxu0 %v366
    %1940 = vmatprep.subr.mxu0 %v370
    %1941 = vmatpush1.msra.mxu0 %v369
    %1942 = vmatprep.subr.mxu0 %v373
    %1943 = vmatpush1.msra.mxu0 %v372
    %1944 = vmatprep.subr.mxu0 %v376
    %1945 = vmatpush1.msra.mxu0 %v375
    %1946 = vmatprep.subr.mxu0 %v379
    %1947 = vmatpush1.msra.mxu0 %v378
    %1948 = vmatprep.subr.mxu0 %v382
    %1949 = vmatpush1.msra.mxu0 %v381
    %1950 = vmatprep.subr.mxu0 %v385
    %1951 = vmatpush1.msra.mxu0 %v384
    %1952 = vmatprep.subr.mxu0 %v388
    %1953 = vmatpush1.msra.mxu0 %v387
    %1954 = vmatprep.subr.mxu0 %v391
    %1955 = vmatpush1.msra.mxu0 %v390
    %1956 = vmatprep.subr.mxu0 %v394
    %1957 = vmatpush1.msra.mxu0 %v393
    %1958 = vmatprep.subr.mxu0 %v397
    %1959 = vmatpush1.msra.mxu0 %v396
    %1960 = vmatprep.subr.mxu0 %v400
    %1961 = vmatpush1.msra.mxu0 %v399
    %1962 = vmatprep.subr.mxu0 %v403
    %1963 = vmatpush1.msra.mxu0 %v402
    %1964 = vmatprep.subr.mxu0 %v406
    %1965 = vmatpush1.msra.mxu0 %v405
    %1966 = vmatprep.subr.mxu0 0.0
    %1967 = vmatpush1.msra.mxu0 0.0
    %1968 = vmatprep.subr.mxu0 0.0
    %1969 = vmatpush1.msra.mxu0 0.0
    %1970 = vmatprep.subr.mxu0 0.0
    %1971 = vmatpush1.msra.mxu0 0.0
    %1972 = vmatprep.subr.mxu0 0.0
    %1973 = vmatpush1.msra.mxu0 0.0
    %1974 = vmatprep.subr.mxu0 0.0
    %1975 = vmatpush1.msra.mxu0 0.0
    %1976 = vmatprep.subr.mxu0 0.0
    %1977 = vmatpush1.msra.mxu0 0.0
    %1978 = vmatprep.subr.mxu0 0.0
    %1979 = vmatpush1.msra.mxu0 0.0
    %1980 = vmatprep.subr.mxu0 0.0
    %1981 = vmatpush1.msra.mxu0 0.0
    %1982 = vmatprep.subr.mxu0 0.0
    %1983 = vmatpush1.msra.mxu0 0.0
    %1984 = vmatprep.subr.mxu0 0.0
    %1985 = vmatpush1.msra.mxu0 0.0
    %1986 = vmatprep.subr.mxu0 0.0
    %1987 = vmatpush1.msra.mxu0 0.0
    %1988 = vmatprep.subr.mxu0 0.0
    %1989 = vmatpush1.msra.mxu0 0.0
    %1990 = vmatprep.subr.mxu0 0.0
    %1991 = vmatpush1.msra.mxu0 0.0
    %1992 = vmatprep.subr.mxu0 0.0
    %1993 = vmatpush1.msra.mxu0 0.0
    %1994 = vmatprep.subr.mxu0 0.0
    %1995 = vmatpush1.msra.mxu0 0.0
    %1996 = vmatprep.subr.mxu0 0.0
    %1997 = vmatpush1.msra.mxu0 0.0
    %1998 = vmatprep.mubr.f32.mxu0 0.0
    %1999 = vmatmul.mubr.f32.gmra.mrb[0].mxu0 %v1878
    %v2000 = vpop.f32.mrb[0].mxu0
    %v2001 = vadd.f32 0.0, %v2000
    %v2002 = vpop.f32.mrb[0].mxu0
    %v2003 = vadd.f32 0.0, %v2002
    %2004 = vdwg.mxu0
    %2005 = vmatprep.subr.mxu0 0.0
    %2006 = vmatpush1.msra.mxu0 %v362
    %2007 = vmatprep.subr.mxu0 0.0
    %2008 = vmatpush1.msra.mxu0 %v365
    %2009 = vmatprep.subr.mxu0 0.0
    %2010 = vmatpush1.msra.mxu0 %v368
    %2011 = vmatprep.subr.mxu0 0.0
    %2012 = vmatpush1.msra.mxu0 %v371
    %2013 = vmatprep.subr.mxu0 0.0
    %2014 = vmatpush1.msra.mxu0 %v374
    %2015 = vmatprep.subr.mxu0 0.0
    %2016 = vmatpush1.msra.mxu0 %v377
    %2017 = vmatprep.subr.mxu0 0.0
    %2018 = vmatpush1.msra.mxu0 %v380
    %2019 = vmatprep.subr.mxu0 0.0
    %2020 = vmatpush1.msra.mxu0 %v383
    %2021 = vmatprep.subr.mxu0 0.0
    %2022 = vmatpush1.msra.mxu0 %v386
    %2023 = vmatprep.subr.mxu0 0.0
    %2024 = vmatpush1.msra.mxu0 %v389
    %2025 = vmatprep.subr.mxu0 0.0
    %2026 = vmatpush1.msra.mxu0 %v392
    %2027 = vmatprep.subr.mxu0 0.0
    %2028 = vmatpush1.msra.mxu0 %v395
    %2029 = vmatprep.subr.mxu0 0.0
    %2030 = vmatpush1.msra.mxu0 %v398
    %2031 = vmatprep.subr.mxu0 0.0
    %2032 = vmatpush1.msra.mxu0 %v401
    %2033 = vmatprep.subr.mxu0 0.0
    %2034 = vmatpush1.msra.mxu0 %v404
    %2035 = vmatprep.subr.mxu0 0.0
    %2036 = vmatpush1.msra.mxu0 %v407
    %2037 = vmatprep.subr.mxu0 0.0
    %2038 = vmatpush1.msra.mxu0 0.0
    %2039 = vmatprep.subr.mxu0 0.0
    %2040 = vmatpush1.msra.mxu0 0.0
    %2041 = vmatprep.subr.mxu0 0.0
    %2042 = vmatpush1.msra.mxu0 0.0
    %2043 = vmatprep.subr.mxu0 0.0
    %2044 = vmatpush1.msra.mxu0 0.0
    %2045 = vmatprep.subr.mxu0 0.0
    %2046 = vmatpush1.msra.mxu0 0.0
    %2047 = vmatprep.subr.mxu0 0.0
    %2048 = vmatpush1.msra.mxu0 0.0
    %2049 = vmatprep.subr.mxu0 0.0
    %2050 = vmatpush1.msra.mxu0 0.0
    %2051 = vmatprep.subr.mxu0 0.0
    %2052 = vmatpush1.msra.mxu0 0.0
    %2053 = vmatprep.subr.mxu0 0.0
    %2054 = vmatpush1.msra.mxu0 0.0
    %2055 = vmatprep.subr.mxu0 0.0
    %2056 = vmatpush1.msra.mxu0 0.0
    %2057 = vmatprep.subr.mxu0 0.0
    %2058 = vmatpush1.msra.mxu0 0.0
    %2059 = vmatprep.subr.mxu0 0.0
    %2060 = vmatpush1.msra.mxu0 0.0
    %2061 = vmatprep.subr.mxu0 0.0
    %2062 = vmatpush1.msra.mxu0 0.0
    %2063 = vmatprep.subr.mxu0 0.0
    %2064 = vmatpush1.msra.mxu0 0.0
    %2065 = vmatprep.subr.mxu0 0.0
    %2066 = vmatpush1.msra.mxu0 0.0
    %2067 = vmatprep.subr.mxu0 0.0
    %2068 = vmatpush1.msra.mxu0 0.0
    %2069 = vmatprep.mubr.f32.mxu0 0.0
    %2070 = vmatmul.mubr.f32.gmra.mrb[0].mxu0 %v1878
    %v2071 = vpop.f32.mrb[0].mxu0
    %v2072 = vadd.f32 0.0, %v2071
    %v2073 = vpop.f32.mrb[0].mxu0
    %2074 = vdwg.mxu0
    %v2075 = vadd.f32 %v1931, %v2001
    %v2076 = vxor.u32 %v2075, 2147483648
    %v2077 = vmul.f32 %v2076, 1.442695
    %v2078 = vpow.pop %v2077
    %v2079 = vadd.f32 %v2078, 1.0
    %v2080 = vrcp.pop %v2079
    %v2081 = vmul.f32 1.0, %v2080
    %v2082 = vadd.f32 %v1932, %v2003
    %v2083 = vxor.u32 %v2082, 2147483648
    %v2084 = vmul.f32 %v2083, 1.442695
    %v2085 = vpow.pop %v2084
    %v2086 = vadd.f32 %v2085, 1.0
    %v2087 = vrcp.pop %v2086
    %v2088 = vmul.f32 1.0, %v2087
    %v2089 = vadd.f32 %v2072, %v302
    %v2090 = vmul.f32 %v2081, %v2089
    %v2091 = vadd.f32 %v1933, %v2090
    %v2092 = vtanh.pop %v2091
    %v2093 = vsub.f32 1.0, %v2088
    %v2094 = vmul.f32 %v2093, %v2092
    %v2095 = vmul.f32 %v2088, %v1878
    %v2096 = vadd.f32 %v2094, %v2095
    %v2097 = vld [vmem:[#allocation8] sm:$0xff]
    %v2098 = vld [vmem:[#allocation8 + $0x8] sm:$0xff]
    %v2099 = vld [vmem:[#allocation8 + $0x10] sm:$0xff]
    %v2100 = vld [vmem:[#allocation8 + $0x18] sm:$0xff]
    %v2101 = vld [vmem:[#allocation8 + $0x20] sm:$0xff]
    %v2102 = vld [vmem:[#allocation8 + $0x28] sm:$0xff]
    %v2103 = vld [vmem:[#allocation8 + $0x30] sm:$0xff]
    %v2104 = vld [vmem:[#allocation8 + $0x38] sm:$0xff]
    %v2105 = vld [vmem:[#allocation8 + $0x40] sm:$0xff]
    %v2106 = vld [vmem:[#allocation8 + $0x48] sm:$0xff]
    %v2107 = vld [vmem:[#allocation8 + $0x50] sm:$0xff]
    %v2108 = vld [vmem:[#allocation8 + $0x58] sm:$0xff]
    %v2109 = vld [vmem:[#allocation8 + $0x60] sm:$0xff]
    %v2110 = vld [vmem:[#allocation8 + $0x68] sm:$0xff]
    %v2111 = vld [vmem:[#allocation8 + $0x70] sm:$0xff]
    %v2112 = vld [vmem:[#allocation8 + $0x78] sm:$0xff]
    %v2113 = vld [vmem:[%s7] sm:$0x1]
    %v2115 = vlaneseq
    %v2116 = vshrl.u32 %v2115, 7
    %v2117 = vsub.s32 0, %v2116
    %v2118 = vrot.slane %v2113, %v2117
    %2120 = vmatprep.subr.mxu0 0.0
    %2121 = vmatpush1.msra.mxu0 %v2097
    %2122 = vmatprep.subr.mxu0 0.0
    %2123 = vmatpush1.msra.mxu0 %v2098
    %2124 = vmatprep.subr.mxu0 0.0
    %2125 = vmatpush1.msra.mxu0 %v2099
    %2126 = vmatprep.subr.mxu0 0.0
    %2127 = vmatpush1.msra.mxu0 %v2100
    %2128 = vmatprep.subr.mxu0 0.0
    %2129 = vmatpush1.msra.mxu0 %v2101
    %2130 = vmatprep.subr.mxu0 0.0
    %2131 = vmatpush1.msra.mxu0 %v2102
    %2132 = vmatprep.subr.mxu0 0.0
    %2133 = vmatpush1.msra.mxu0 %v2103
    %2134 = vmatprep.subr.mxu0 0.0
    %2135 = vmatpush1.msra.mxu0 %v2104
    %2136 = vmatprep.subr.mxu0 0.0
    %2137 = vmatpush1.msra.mxu0 %v2105
    %2138 = vmatprep.subr.mxu0 0.0
    %2139 = vmatpush1.msra.mxu0 %v2106
    %2140 = vmatprep.subr.mxu0 0.0
    %2141 = vmatpush1.msra.mxu0 %v2107
    %2142 = vmatprep.subr.mxu0 0.0
    %2143 = vmatpush1.msra.mxu0 %v2108
    %2144 = vmatprep.subr.mxu0 0.0
    %2145 = vmatpush1.msra.mxu0 %v2109
    %2146 = vmatprep.subr.mxu0 0.0
    %2147 = vmatpush1.msra.mxu0 %v2110
    %2148 = vmatprep.subr.mxu0 0.0
    %2149 = vmatpush1.msra.mxu0 %v2111
    %2150 = vmatprep.subr.mxu0 0.0
    %2151 = vmatpush1.msra.mxu0 %v2112
    %2152 = vmatprep.subr.mxu0 0.0
    %2153 = vmatpush1.msra.mxu0 0.0
    %2154 = vmatprep.subr.mxu0 0.0
    %2155 = vmatpush1.msra.mxu0 0.0
    %2156 = vmatprep.subr.mxu0 0.0
    %2157 = vmatpush1.msra.mxu0 0.0
    %2158 = vmatprep.subr.mxu0 0.0
    %2159 = vmatpush1.msra.mxu0 0.0
    %2160 = vmatprep.subr.mxu0 0.0
    %2161 = vmatpush1.msra.mxu0 0.0
    %2162 = vmatprep.subr.mxu0 0.0
    %2163 = vmatpush1.msra.mxu0 0.0
    %2164 = vmatprep.subr.mxu0 0.0
    %2165 = vmatpush1.msra.mxu0 0.0
    %2166 = vmatprep.subr.mxu0 0.0
    %2167 = vmatpush1.msra.mxu0 0.0
    %2168 = vmatprep.subr.mxu0 0.0
    %2169 = vmatpush1.msra.mxu0 0.0
    %2170 = vmatprep.subr.mxu0 0.0
    %2171 = vmatpush1.msra.mxu0 0.0
    %2172 = vmatprep.subr.mxu0 0.0
    %2173 = vmatpush1.msra.mxu0 0.0
    %2174 = vmatprep.subr.mxu0 0.0
    %2175 = vmatpush1.msra.mxu0 0.0
    %2176 = vmatprep.subr.mxu0 0.0
    %2177 = vmatpush1.msra.mxu0 0.0
    %2178 = vmatprep.subr.mxu0 0.0
    %2179 = vmatpush1.msra.mxu0 0.0
    %2180 = vmatprep.subr.mxu0 0.0
    %2181 = vmatpush1.msra.mxu0 0.0
    %2182 = vmatprep.subr.mxu0 0.0
    %2183 = vmatpush1.msra.mxu0 0.0
    %2184 = vmatprep.mubr.f32.mxu0 0.0
    %2185 = vmatmul.mubr.f32.gmra.mrb[0].mxu0 %v2096
    %v2186 = vpop.f32.mrb[0].mxu0
    %v2187 = vadd.f32 %v2118, %v2186
    %v2188 = vpop.f32.mrb[0].mxu0
    %2189 = vdwg.mxu0
    %vm2190 = vcmask 1041408
    %v2191 = vsel %vm2190, %v2187, -inf
    %2192 = vmax.xlane.f32.xlu0 %v2191
    %v2193 = vpop.xlane.xlu0 %2192
    %v2194 = vsub.f32 %v2187, %v2193
    %v2195 = vmul.f32 %v2194, 1.442695
    %v2196 = vpow.pop %v2195
    %v2197 = vsel %vm2190, %v2196, 0.0
    %2198 = vadd.xlane.f32.xlu0 %v2197
    %v2199 = vpop.xlane.xlu0 %2198
    %v2200 = vrcp.pop %v2199
    %v2201 = vmul.f32 %v2196, %v2200
    %2202 = vst [vmem:[#allocation10] sm:$0x3] %v2201
    // Predicated region
    $region46: #{rnn_classifier_forward.1} parent=1 // pred_check
      _
    $region47: #{rnn_classifier_forward.1} parent=1 // pred_check_branch
      %2204 = sbr.rel (0) target = $region49
    $region48: #{rnn_classifier_forward.1} parent=1 // pred_region
      %s2206 = ssub.s32 32, 32
      %2207 = vsyncadd [#allocation5], %s2206
      %s2209 = sshll.u32 [#allocation10], 4
      %s2210 = int_to_ptr.vmem [resolvable:$true] %s2209
      %2212 = dma.vmem_to_hbm [thread:$0]  %s2210, 32, %s8, [#allocation5]
    $region49: #{rnn_classifier_forward.1} parent=1 // pred_fallthru
      _
    // Predicated region
    $region50: #{rnn_classifier_forward.1} parent=1 // pred_check
      _
    $region51: #{rnn_classifier_forward.1} parent=1 // pred_check_branch
      %2214 = sbr.rel (0) target = $region53
    $region52: #{rnn_classifier_forward.1} parent=1 // pred_region
      %2215 = dma.done [#allocation5], 32
    $region53: #{rnn_classifier_forward.1} parent=1 // pred_fallthru
      _
    %2216 = vsyncpa [#allocation4], 1
    %2217 = vsyncpa [#allocation9], 1
    %2218 = vsyncpa [#allocation5], 1
    %2219 = vsyncpa [#allocation6], 1

</llo_original>
